<compile_context>
chip_gen: v6e
topology: v6e:2x2x1
jax: 0.10.0
libtpu: 0.0.40
codegen_flags: <defaults>
</compile_context>

<pallas_src>
import functools
import math

import jax
import jax.numpy as jnp
from jax import lax
from jax.experimental import pallas as pl
from jax.experimental.pallas import tpu as pltpu


def mha_kernel(x_ref, wqkv_ref, bqkv_ref, wp_ref, bp_ref, o_ref, *,
               num_heads, d_qk, d_v):
    """One batch element per grid step: fused head-batched QKV projection,
    head-batched causal attention, ReLU, head-batched output projection summed
    over heads into a lane-dense [T, 128] store."""
    H = num_heads
    x = x_ref[...]                                   # [T, Din]
    T = x.shape[0]

    # --- fused Q|K|V projection, batched over heads (one dot_general).
    # wqkv columns are [q | k | v] per head; 1/sqrt(d_qk) already folded into q.
    xb = jnp.broadcast_to(x, (H, T, x.shape[1]))     # replicate rows per head
    qkv = lax.dot_general(
        xb, wqkv_ref[...],
        dimension_numbers=(((2,), (1,)), ((0,), (0,))),
        preferred_element_type=jnp.float32) + bqkv_ref[...]   # [H, T, 2*Dqk+Dv]

    q = qkv[:, :, :d_qk]                             # [H, T, Dqk]
    k = qkv[:, :, d_qk:2 * d_qk]                     # [H, T, Dqk]
    v = qkv[:, :, 2 * d_qk:]                         # [H, T, Dv]

    # --- causal mask: per-batch grid => plain lower-triangular compare.
    row = lax.broadcasted_iota(jnp.int32, (T, T), 0)
    col = lax.broadcasted_iota(jnp.int32, (T, T), 1)
    causal = row >= col                              # [T, T], broadcast over H

    # --- scores, all heads at once: [H, T, T]
    s = lax.dot_general(q, k,
                        dimension_numbers=(((2,), (2,)), ((0,), (0,))),
                        preferred_element_type=jnp.float32)
    s = jnp.where(causal, s, jnp.float32(-1e30))     # large finite negative

    # --- softmax (f32 on VPU/EUP; every row has its diagonal unmasked).
    m = jnp.max(s, axis=-1, keepdims=True)
    p = jnp.exp(s - m)
    denom = jnp.sum(p, axis=-1, keepdims=True)
    p = p * pl.reciprocal(denom, approx=True)        # EUP slot, effectively free

    # --- attention output per head + ReLU: [H, T, Dv]
    o = lax.dot_general(p, v,
                        dimension_numbers=(((2,), (1,)), ((0,), (0,))),
                        preferred_element_type=jnp.float32)
    act = jnp.maximum(o, 0.0)                        # activation = relu

    # --- output projection WITHOUT concat / VMEM scratch:
    # out[t,:] = sum_h relu(o)[h,t,:] @ wp[h*Dv:(h+1)*Dv, :]  (+ bp)
    # wp_ref is pre-reshaped to [H, Dv, 128] (zero-padded lanes) so the final
    # store is a full-lane (unmasked) vst.
    per_head = lax.dot_general(act, wp_ref[...],
                               dimension_numbers=(((2,), (1,)), ((0,), (0,))),
                               preferred_element_type=jnp.float32)  # [H, T, 128]
    out = jnp.sum(per_head, axis=0) + bp_ref[...]    # [T, 128]
    o_ref[...] = out.astype(o_ref.dtype)             # lane-dense store
    # TODO(synk): dropout_p=0.0 (eval semantics) so all Dropout layers are identity.


def pack_mha_params(params):
    """One-time (init-time) packing — NOT in the per-call path."""
    wq, bq, wk, bk, wv, bv, wp, bp = params
    H, Din, Dqk = wq.shape
    Dv = wv.shape[2]
    Dout = wp.shape[1]
    LANE = 128
    Dpad = ((Dout + LANE - 1) // LANE) * LANE

    scale = 1.0 / math.sqrt(Dqk)
    # Per-head fused projection weight/bias: [H, Din, Dqk+Dqk+Dv]; fold scale into Q.
    wqkv = jnp.concatenate([wq * scale, wk, wv], axis=2).astype(jnp.float32)
    bqkv = jnp.concatenate([bq * scale, bk, bv], axis=2).astype(jnp.float32)
    # Output projection split per head and zero-padded to 128 lanes.
    wp3 = jnp.zeros((H, Dv, Dpad), jnp.float32).at[:, :, :Dout].set(
        wp.reshape(H, Dv, Dout))
    bp_pad = jnp.zeros((1, Dpad), jnp.float32).at[:, :Dout].set(bp)
    return wqkv, bqkv, wp3, bp_pad


@functools.partial(jax.jit, static_argnames=("d_out",))
def multi_head_attention(x, wqkv, bqkv, wp3, bp_pad, *, d_out):
    B, T, Din = x.shape
    H = wqkv.shape[0]
    Dproj = wqkv.shape[2]
    Dv = wp3.shape[1]
    Dqk = (Dproj - Dv) // 2
    Dpad = wp3.shape[2]

    out_wide = pl.pallas_call(
        functools.partial(mha_kernel, num_heads=H, d_qk=Dqk, d_v=Dv),
        out_shape=jax.ShapeDtypeStruct((B, T, Dpad), jnp.float32),
        grid=(B,),
        in_specs=[
            pl.BlockSpec((None, T, Din), lambda b: (b, 0, 0)),      # x (per batch)
            pl.BlockSpec((H, Din, Dproj), lambda b: (0, 0, 0)),     # fused QKV W
            pl.BlockSpec((H, 1, Dproj), lambda b: (0, 0, 0)),       # fused QKV b
            pl.BlockSpec((H, Dv, Dpad), lambda b: (0, 0, 0)),       # proj W (padded)
            pl.BlockSpec((1, Dpad), lambda b: (0, 0)),              # proj b (padded)
        ],
        out_specs=pl.BlockSpec((None, T, Dpad), lambda b: (b, 0, 0)),
        compiler_params=pltpu.CompilerParams(
            dimension_semantics=("parallel",)),                     # megacore on v7x
    )(x, wqkv, bqkv, wp3, bp_pad)

    return out_wide[..., :d_out]                     # drop lane padding


def reference(x, params):
    wq, bq, wk, bk, wv, bv, wp, bp = params
    d_qk = wq.shape[2]
    T = x.shape[1]
    q = jnp.einsum("btd,hde->bhte", x, wq) + bq[None, :, :, :]       # [B,H,T,Dqk]
    k = jnp.einsum("btd,hde->bhte", x, wk) + bk[None, :, :, :]
    v = jnp.einsum("btd,hde->bhte", x, wv) + bv[None, :, :, :]
    s = jnp.einsum("bhqe,bhke->bhqk", q, k) / math.sqrt(d_qk)
    mask = jnp.tril(jnp.ones((T, T), dtype=bool))
    s = jnp.where(mask, s, -jnp.inf)
    p = jax.nn.softmax(s, axis=-1)
    o = jnp.einsum("bhqk,bhkv->bhqv", p, v)                          # [B,H,T,Dv]
    cat = jnp.transpose(o, (0, 2, 1, 3)).reshape(x.shape[0], T, -1)  # [B,T,H*Dv]
    act = jax.nn.relu(cat)
    return act @ wp + bp


if __name__ == "__main__":
    # Model config (matches MultiHeadAttention __init__ shapes)
    B, T = 2, 8                 # batch, context_size (seq)
    Din = 32                    # input_size
    Dqk = 16                    # query_key_emb_size
    Dv = 16                     # value_emb_size
    H = 4                       # num_head
    Dout = 32                   # output_size

    key = jax.random.PRNGKey(0)
    keys = jax.random.split(key, 10)
    init = lambda k, shape, fan_in: jax.random.uniform(
        k, shape, jnp.float32, -1.0 / math.sqrt(fan_in), 1.0 / math.sqrt(fan_in))

    # Per-head stacked parameters: W as [H, D_in, D_out], biases as [H, 1, D_out]
    wq = init(keys[0], (H, Din, Dqk), Din)
    bq = init(keys[1], (H, 1, Dqk), Din)
    wk = init(keys[2], (H, Din, Dqk), Din)
    bk = init(keys[3], (H, 1, Dqk), Din)
    wv = init(keys[4], (H, Din, Dv), Din)
    bv = init(keys[5], (H, 1, Dv), Din)
    wp = init(keys[6], (H * Dv, Dout), H * Dv)   # proj: [H*Dv, Dout]
    bp = init(keys[7], (1, Dout), H * Dv)

    x = jax.random.normal(keys[8], (B, T, Din), jnp.float32)

    params = (wq, bq, wk, bk, wv, bv, wp, bp)

    # Pack/pad weights once (init time), then the jitted forward only does the
    # pallas_call plus a fused slice.
    wqkv, bqkv, wp3, bp_pad = pack_mha_params(params)

    out = multi_head_attention(x, wqkv, bqkv, wp3, bp_pad, d_out=Dout)
    out = jax.block_until_ready(out)

    ref = reference(x, params)
    assert out.shape == (B, T, Dout)
    # Slightly looser tolerance: softmax uses the approximate EUP reciprocal.
    assert jnp.allclose(out, ref, atol=2e-3, rtol=2e-3), "mismatch vs reference"
    print("KERNEL_OK")
</pallas_src>

<mosaic_0001>
module attributes {stable_mosaic.version = 11 : i64} {
  func.func @mha_kernel(%arg0: i32, %arg1: memref<1x8x32xf32, #tpu.memory_space<vmem>>, %arg2: memref<4x32x48xf32, #tpu.memory_space<vmem>>, %arg3: memref<4x1x48xf32, #tpu.memory_space<vmem>>, %arg4: memref<4x16x128xf32, #tpu.memory_space<vmem>>, %arg5: memref<1x128xf32, #tpu.memory_space<vmem>>, %arg6: memref<1x8x128xf32, #tpu.memory_space<vmem>>) attributes {dimension_semantics = [#tpu.dimension_semantics<parallel>], iteration_bounds = array<i64: 2>, scalar_prefetch = 0 : i64, scratch_operands = 0 : i64, tpu.core_type = #tpu.core_type<tc>, window_params = [{transform_indices = @transform_0, window_bounds = array<i64: 1, 8, 32>}, {pipeline_mode = #tpu.pipeline_mode<synchronous>, transform_indices = @transform_1, window_bounds = array<i64: 4, 32, 48>}, {pipeline_mode = #tpu.pipeline_mode<synchronous>, transform_indices = @transform_2, window_bounds = array<i64: 4, 1, 48>}, {pipeline_mode = #tpu.pipeline_mode<synchronous>, transform_indices = @transform_3, window_bounds = array<i64: 4, 16, 128>}, {pipeline_mode = #tpu.pipeline_mode<synchronous>, transform_indices = @transform_4, window_bounds = array<i64: 1, 128>}, {transform_indices = @transform_5, window_bounds = array<i64: 1, 8, 128>}]} {
    %c0 = arith.constant 0 : index
    %c0_0 = arith.constant 0 : index
    %c0_1 = arith.constant 0 : index
    %0 = vector.load %arg1[%c0, %c0_0, %c0_1] : memref<1x8x32xf32, #tpu.memory_space<vmem>>, vector<1x8x32xf32>
    %1 = vector.shape_cast %0 : vector<1x8x32xf32> to vector<8x32xf32>
    %2 = vector.shape_cast %1 : vector<8x32xf32> to vector<1x8x32xf32>
    %3 = vector.broadcast %2 : vector<1x8x32xf32> to vector<4x8x32xf32>
    %c0_2 = arith.constant 0 : index
    %c0_3 = arith.constant 0 : index
    %c0_4 = arith.constant 0 : index
    %4 = vector.load %arg2[%c0_2, %c0_3, %c0_4] : memref<4x32x48xf32, #tpu.memory_space<vmem>>, vector<4x32x48xf32>
    %cst = arith.constant dense<0.000000e+00> : vector<4x8x48xf32>
    %5 = tpu.matmul %3, %4, %cst {dimension_numbers = #tpu.dot_dimension_numbers<[2], [1], [1], [2], [0, 0, 0, 1, 1, 2], [0], [0]>} : vector<4x8x32xf32>, vector<4x32x48xf32>, vector<4x8x48xf32> -> vector<4x8x48xf32>
    %c0_5 = arith.constant 0 : index
    %c0_6 = arith.constant 0 : index
    %c0_7 = arith.constant 0 : index
    %6 = vector.load %arg3[%c0_5, %c0_6, %c0_7] : memref<4x1x48xf32, #tpu.memory_space<vmem>>, vector<4x1x48xf32>
    %7 = vector.broadcast %6 : vector<4x1x48xf32> to vector<4x8x48xf32>
    %8 = arith.addf %5, %7 : vector<4x8x48xf32>
    %9 = vector.extract_strided_slice %8 {offsets = [0, 0, 0], sizes = [4, 8, 16], strides = [1, 1, 1]} : vector<4x8x48xf32> to vector<4x8x16xf32>
    %10 = vector.extract_strided_slice %8 {offsets = [0, 0, 16], sizes = [4, 8, 16], strides = [1, 1, 1]} : vector<4x8x48xf32> to vector<4x8x16xf32>
    %11 = vector.extract_strided_slice %8 {offsets = [0, 0, 32], sizes = [4, 8, 16], strides = [1, 1, 1]} : vector<4x8x48xf32> to vector<4x8x16xf32>
    %12 = tpu.iota {dimensions = array<i32: 0>} : vector<8x8xi32>
    %13 = tpu.iota {dimensions = array<i32: 1>} : vector<8x8xi32>
    %14 = arith.cmpi sge, %12, %13 : vector<8x8xi32>
    %cst_8 = arith.constant dense<0.000000e+00> : vector<4x8x8xf32>
    %15 = tpu.matmul %9, %10, %cst_8 {dimension_numbers = #tpu.dot_dimension_numbers<[2], [2], [1], [1], [0, 0, 0, 1, 1, 1], [0], [0]>} : vector<4x8x16xf32>, vector<4x8x16xf32>, vector<4x8x8xf32> -> vector<4x8x8xf32>
    %cst_9 = arith.constant -1.000000e+30 : f32
    %16 = vector.shape_cast %14 : vector<8x8xi1> to vector<1x8x8xi1>
    %17 = vector.broadcast %16 : vector<1x8x8xi1> to vector<4x8x8xi1>
    %18 = vector.broadcast %cst_9 : f32 to vector<4x8x8xf32>
    %19 = arith.select %17, %15, %18 : vector<4x8x8xi1>, vector<4x8x8xf32>
    %cst_10 = arith.constant dense<0xFF800000> : vector<4x8xf32>
    %20 = vector.multi_reduction <maximumf>, %19, %cst_10 [2] : vector<4x8x8xf32> to vector<4x8xf32>
    %21 = vector.shape_cast %20 : vector<4x8xf32> to vector<4x8x1xf32>
    %22 = vector.broadcast %21 : vector<4x8x1xf32> to vector<4x8x8xf32>
    %23 = arith.subf %19, %22 : vector<4x8x8xf32>
    %24 = math.exp %23 : vector<4x8x8xf32>
    %cst_11 = arith.constant dense<0.000000e+00> : vector<4x8xf32>
    %25 = vector.multi_reduction <add>, %24, %cst_11 [2] : vector<4x8x8xf32> to vector<4x8xf32>
    %26 = vector.shape_cast %25 : vector<4x8xf32> to vector<4x8x1xf32>
    %27 = tpu.reciprocal %26 {approx = true} : vector<4x8x1xf32> -> vector<4x8x1xf32>
    %28 = vector.broadcast %27 : vector<4x8x1xf32> to vector<4x8x8xf32>
    %29 = arith.mulf %24, %28 : vector<4x8x8xf32>
    %cst_12 = arith.constant dense<0.000000e+00> : vector<4x8x16xf32>
    %30 = tpu.matmul %29, %11, %cst_12 {dimension_numbers = #tpu.dot_dimension_numbers<[2], [1], [1], [2], [0, 0, 0, 1, 1, 2], [0], [0]>} : vector<4x8x8xf32>, vector<4x8x16xf32>, vector<4x8x16xf32> -> vector<4x8x16xf32>
    %cst_13 = arith.constant 0.000000e+00 : f32
    %31 = vector.broadcast %cst_13 : f32 to vector<4x8x16xf32>
    %32 = arith.maximumf %30, %31 : vector<4x8x16xf32>
    %c0_14 = arith.constant 0 : index
    %c0_15 = arith.constant 0 : index
    %c0_16 = arith.constant 0 : index
    %33 = vector.load %arg4[%c0_14, %c0_15, %c0_16] : memref<4x16x128xf32, #tpu.memory_space<vmem>>, vector<4x16x128xf32>
    %cst_17 = arith.constant dense<0.000000e+00> : vector<4x8x128xf32>
    %34 = tpu.matmul %32, %33, %cst_17 {dimension_numbers = #tpu.dot_dimension_numbers<[2], [1], [1], [2], [0, 0, 0, 1, 1, 2], [0], [0]>} : vector<4x8x16xf32>, vector<4x16x128xf32>, vector<4x8x128xf32> -> vector<4x8x128xf32>
    %cst_18 = arith.constant dense<0.000000e+00> : vector<8x128xf32>
    %35 = vector.multi_reduction <add>, %34, %cst_18 [0] : vector<4x8x128xf32> to vector<8x128xf32>
    %c0_19 = arith.constant 0 : index
    %c0_20 = arith.constant 0 : index
    %36 = vector.load %arg5[%c0_19, %c0_20] : memref<1x128xf32, #tpu.memory_space<vmem>>, vector<1x128xf32>
    %37 = vector.broadcast %36 : vector<1x128xf32> to vector<8x128xf32>
    %38 = arith.addf %35, %37 : vector<8x128xf32>
    %c0_21 = arith.constant 0 : index
    %c0_22 = arith.constant 0 : index
    %c0_23 = arith.constant 0 : index
    %39 = vector.load %arg6[%c0_21, %c0_22, %c0_23] : memref<1x8x128xf32, #tpu.memory_space<vmem>>, vector<1x8x128xf32>
    %40 = vector.shape_cast %39 : vector<1x8x128xf32> to vector<8x128xf32>
    %41 = vector.shape_cast %38 : vector<8x128xf32> to vector<1x8x128xf32>
    tpu.vector_store %arg6[%c0_21, %c0_22, %c0_23], %41 {strides = array<i32>} : memref<1x8x128xf32, #tpu.memory_space<vmem>>, vector<1x8x128xf32>,
    return
  }
  func.func @transform_0(%arg0: i32) -> (i32, i32, i32) {
    %c0_i32 = arith.constant 0 : i32
    %c0_i32_0 = arith.constant 0 : i32
    %c0_i32_1 = arith.constant 0 : i32
    return %arg0, %c0_i32, %c0_i32_0 : i32, i32, i32
  }
  func.func @transform_1(%arg0: i32) -> (i32, i32, i32) {
    %c0_i32 = arith.constant 0 : i32
    %c0_i32_0 = arith.constant 0 : i32
    %c0_i32_1 = arith.constant 0 : i32
    %c0_i32_2 = arith.constant 0 : i32
    return %c0_i32, %c0_i32_0, %c0_i32_1 : i32, i32, i32
  }
  func.func @transform_2(%arg0: i32) -> (i32, i32, i32) {
    %c0_i32 = arith.constant 0 : i32
    %c0_i32_0 = arith.constant 0 : i32
    %c0_i32_1 = arith.constant 0 : i32
    %c0_i32_2 = arith.constant 0 : i32
    return %c0_i32, %c0_i32_0, %c0_i32_1 : i32, i32, i32
  }
  func.func @transform_3(%arg0: i32) -> (i32, i32, i32) {
    %c0_i32 = arith.constant 0 : i32
    %c0_i32_0 = arith.constant 0 : i32
    %c0_i32_1 = arith.constant 0 : i32
    %c0_i32_2 = arith.constant 0 : i32
    return %c0_i32, %c0_i32_0, %c0_i32_1 : i32, i32, i32
  }
  func.func @transform_4(%arg0: i32) -> (i32, i32) {
    %c0_i32 = arith.constant 0 : i32
    %c0_i32_0 = arith.constant 0 : i32
    %c0_i32_1 = arith.constant 0 : i32
    return %c0_i32, %c0_i32_0 : i32, i32
  }
  func.func @transform_5(%arg0: i32) -> (i32, i32, i32) {
    %c0_i32 = arith.constant 0 : i32
    %c0_i32_0 = arith.constant 0 : i32
    %c0_i32_1 = arith.constant 0 : i32
    return %arg0, %c0_i32, %c0_i32_0 : i32, i32, i32
  }
}

</mosaic_0001>

<llo_original>
// kernel: multi_head_attention.1
$region0: #{multi_head_attention.1}
  #allocation0 [shape = 'u32[]', space=smem, size = 0x4, offset = 0x4, fixed_abs, tag = 'smem constant byte address 0x4 - core index']
  #allocation1 [shape = 'u32[144,128]{1,0:T(1,128)}', space=vmem, size = 0x12000, scoped, tag = 'internal scratch']
  %s0 = inlined_call_operand.hbm [shape: f32[2,8,32], index: 0, kind: input, shape index: {}]
  %s1 = inlined_call_operand.hbm [shape: f32[4,32,48], index: 1, kind: input, shape index: {}]
  %s2 = inlined_call_operand.hbm [shape: f32[4,1,48], index: 2, kind: input, shape index: {}]
  %s3 = inlined_call_operand.hbm [shape: f32[4,16,128], index: 3, kind: input, shape index: {}]
  %s4 = inlined_call_operand.vmem [shape: f32[1,128], index: 4, kind: input, shape index: {}]
  %s5 = inlined_call_operand.hbm [shape: f32[2,8,128], index: 5, kind: output, shape index: {}]
  %s6 = sld [smem:[#allocation0]]
  $region69: #{multi_head_attention.1} parent=0
    _
  %s8 = ssub.s32 1, %s6
  %s9 = scalar_select 0, %s8, %s6
  $region1: #{multi_head_attention.1} parent=0
    #allocation2 [shape = 'u8[8192]{0}', space=vmem, size = 0x2000, scoped, tag = 'input window, operand 0']
    #allocation3 [shape = 's32[2]{0}', space=sflag, size = 0x8, scoped, tag = 'scoped memory for multi_head_attention.1']
    #allocation4 [shape = 's32[2]{0}', space=sflag, size = 0x8, scoped, tag = 'scoped memory for multi_head_attention.1']
    #allocation5 [shape = 'u8[65536]{0}', space=vmem, size = 0x10000, scoped, tag = 'input window, operand 1, single buffered']
    #allocation6 [shape = 's32[1]{0}', space=sflag, size = 0x4, scoped, tag = 'scoped memory for multi_head_attention.1']
    #allocation7 [shape = 'u8[2048]{0}', space=vmem, size = 0x800, scoped, tag = 'input window, operand 2, single buffered']
    #allocation8 [shape = 'u8[32768]{0}', space=vmem, size = 0x8000, scoped, tag = 'input window, operand 3, single buffered']
    #allocation9 [shape = 's32[1]{0}', space=sflag, size = 0x4, scoped, tag = 'scoped memory for multi_head_attention.1']
    #allocation10 [shape = 'u8[8192]{0}', space=vmem, size = 0x2000, scoped, tag = 'output window, operand 0']
    %10 = vsyncpa [#allocation3], 0
    %s11 = scalar_lea.sflag [#allocation3], 1
    %12 = vsyncpa %s11, 0
    %13 = vsyncpa [#allocation6], 0
    %14 = vsyncpa [#allocation9], 0
    %15 = vsyncpa [#allocation4], 0
    %s16 = scalar_lea.sflag [#allocation4], 1
    %17 = vsyncpa %s16, 0
    loop: start=0, step=1, limit=4
    $region2: #{multi_head_attention.1} parent=1 // loop_pre_header
      _
    $region3: #{multi_head_attention.1} parent=1 // loop_header
      %s19 = sphi 0, %s23
      %p20 = scmp.ge.s32.totalorder %s19, 4
      %s29 = sphi 0, %s31
      %s32 = sphi 0, %s29
      %s33 = sphi 0, %s32
      %s49 = sphi 0, %s33
      %s53 = sphi 0, %s53
      %s55 = sphi 0, %s53
      %s56 = sphi 0, %s55
      %s70 = sphi 0, %s56
      %s74 = sphi 0, %s74
      %s76 = sphi 0, %s74
      %s77 = sphi 0, %s76
      %s91 = sphi 0, %s77
      %s95 = sphi 0, %s95
      %s97 = sphi 0, %s95
      %s98 = sphi 0, %s97
      %s112 = sphi 0, %s98
      %s116 = sphi 0, %s116
      %s118 = sphi 0, %s116
      %s119 = sphi 0, %s118
      %s133 = sphi 0, %s119
      %s139 = sphi 0, %s141
      %s142 = sphi 0, %s139
      %s143 = sphi 0, %s142
      %s159 = sphi 0, %s143
    $region4: #{multi_head_attention.1} parent=1 // loop_header_branch
      %22 = sbr.rel (%p20) target = $region8
    $region5: #{multi_head_attention.1} parent=1 // loop_body
      %s24 = ssub.s32 %s19, 1
      %s25 = ssub.s32 %s19, 2
      %s26 = sadd.s32 %s19, 1
      %s27 = ssub.s32 %s19, %s26
      %p28 = scmp.eq.s32.totalorder %s27, 0
      %s30 = sadd.s32 %s29, 1
      %s31 = scalar_select %p28, %s29, %s30
      %p34 = pneg %p28
      %p35 = scmp.eq.s32.totalorder %s19, 1
      %p36 = por %p34, %p35
      %p37 = scmp.ne.s32.totalorder %s29, %s32
      %p38 = scmp.eq.s32.totalorder %s19, 0
      %p39 = por %p37, %p38
      %p40 = scmp.ne.s32.totalorder %s29, %s32
      %p41 = scmp.eq.s32.totalorder %s24, 1
      %p42 = por %p40, %p41
      %p43 = scmp.ne.s32.totalorder %s32, %s33
      %p44 = scmp.eq.s32.totalorder %s24, 0
      %p45 = por %p43, %p44
      %p46 = scmp.ne.s32.totalorder %s32, %s33
      %p47 = scmp.eq.s32.totalorder %s25, 1
      %p48 = por %p46, %p47
      %p50 = scmp.ne.s32.totalorder %s33, %s49
      %p51 = scmp.eq.s32.totalorder %s25, 0
      %p52 = por %p50, %p51
      %s54 = sadd.s32 %s53, 1
      %p57 = scmp.eq.s32.totalorder %s19, 1
      %p58 = scmp.ne.s32.totalorder %s53, %s55
      %p59 = scmp.eq.s32.totalorder %s19, 0
      %p60 = por %p58, %p59
      %p61 = scmp.ne.s32.totalorder %s53, %s55
      %p62 = scmp.eq.s32.totalorder %s24, 1
      %p63 = por %p61, %p62
      %p64 = scmp.ne.s32.totalorder %s55, %s56
      %p65 = scmp.eq.s32.totalorder %s24, 0
      %p66 = por %p64, %p65
      %p67 = scmp.ne.s32.totalorder %s55, %s56
      %p68 = scmp.eq.s32.totalorder %s25, 1
      %p69 = por %p67, %p68
      %p71 = scmp.ne.s32.totalorder %s56, %s70
      %p72 = scmp.eq.s32.totalorder %s25, 0
      %p73 = por %p71, %p72
      %s75 = sadd.s32 %s74, 1
      %p78 = scmp.eq.s32.totalorder %s19, 1
      %p79 = scmp.ne.s32.totalorder %s74, %s76
      %p80 = scmp.eq.s32.totalorder %s19, 0
      %p81 = por %p79, %p80
      %p82 = scmp.ne.s32.totalorder %s74, %s76
      %p83 = scmp.eq.s32.totalorder %s24, 1
      %p84 = por %p82, %p83
      %p85 = scmp.ne.s32.totalorder %s76, %s77
      %p86 = scmp.eq.s32.totalorder %s24, 0
      %p87 = por %p85, %p86
      %p88 = scmp.ne.s32.totalorder %s76, %s77
      %p89 = scmp.eq.s32.totalorder %s25, 1
      %p90 = por %p88, %p89
      %p92 = scmp.ne.s32.totalorder %s77, %s91
      %p93 = scmp.eq.s32.totalorder %s25, 0
      %p94 = por %p92, %p93
      %s96 = sadd.s32 %s95, 1
      %p99 = scmp.eq.s32.totalorder %s19, 1
      %p100 = scmp.ne.s32.totalorder %s95, %s97
      %p101 = scmp.eq.s32.totalorder %s19, 0
      %p102 = por %p100, %p101
      %p103 = scmp.ne.s32.totalorder %s95, %s97
      %p104 = scmp.eq.s32.totalorder %s24, 1
      %p105 = por %p103, %p104
      %p106 = scmp.ne.s32.totalorder %s97, %s98
      %p107 = scmp.eq.s32.totalorder %s24, 0
      %p108 = por %p106, %p107
      %p109 = scmp.ne.s32.totalorder %s97, %s98
      %p110 = scmp.eq.s32.totalorder %s25, 1
      %p111 = por %p109, %p110
      %p113 = scmp.ne.s32.totalorder %s98, %s112
      %p114 = scmp.eq.s32.totalorder %s25, 0
      %p115 = por %p113, %p114
      %s117 = sadd.s32 %s116, 1
      %p120 = scmp.eq.s32.totalorder %s19, 1
      %p121 = scmp.ne.s32.totalorder %s116, %s118
      %p122 = scmp.eq.s32.totalorder %s19, 0
      %p123 = por %p121, %p122
      %p124 = scmp.ne.s32.totalorder %s116, %s118
      %p125 = scmp.eq.s32.totalorder %s24, 1
      %p126 = por %p124, %p125
      %p127 = scmp.ne.s32.totalorder %s118, %s119
      %p128 = scmp.eq.s32.totalorder %s24, 0
      %p129 = por %p127, %p128
      %p130 = scmp.ne.s32.totalorder %s118, %s119
      %p131 = scmp.eq.s32.totalorder %s25, 1
      %p132 = por %p130, %p131
      %p134 = scmp.ne.s32.totalorder %s119, %s133
      %p135 = scmp.eq.s32.totalorder %s25, 0
      %p136 = por %p134, %p135
      %s137 = ssub.s32 %s19, %s26
      %p138 = scmp.eq.s32.totalorder %s137, 0
      %s140 = sadd.s32 %s139, 1
      %s141 = scalar_select %p138, %s139, %s140
      %p144 = pneg %p138
      %p145 = scmp.eq.s32.totalorder %s19, 1
      %p146 = por %p144, %p145
      %p147 = scmp.ne.s32.totalorder %s139, %s142
      %p148 = scmp.eq.s32.totalorder %s19, 0
      %p149 = por %p147, %p148
      %p150 = scmp.ne.s32.totalorder %s139, %s142
      %p151 = scmp.eq.s32.totalorder %s24, 1
      %p152 = por %p150, %p151
      %p153 = scmp.ne.s32.totalorder %s142, %s143
      %p154 = scmp.eq.s32.totalorder %s24, 0
      %p155 = por %p153, %p154
      %p156 = scmp.ne.s32.totalorder %s142, %s143
      %p157 = scmp.eq.s32.totalorder %s25, 1
      %p158 = por %p156, %p157
      %p160 = scmp.ne.s32.totalorder %s143, %s159
      %p161 = scmp.eq.s32.totalorder %s25, 0
      %p162 = por %p160, %p161
      %p163 = scmp.le.s32.totalorder 1, %s19
      %p164 = scmp.lt.s32.totalorder %s19, 3
      %p165 = pnand %p163, %p164
      %p166 = pneg %p165
      // Predicated region
      $region9: #{multi_head_attention.1} parent=5 // pred_check
        _
      $region10: #{multi_head_attention.1} parent=5 // pred_check_branch
        %168 = sbr.rel (%p165) target = $region12
      $region11: #{multi_head_attention.1} parent=5 // pred_region
        %s169 = ssub.s32 %s19, 1
        // Predicated region
        $region13: #{multi_head_attention.1} parent=11 // pred_check
          %p170 = pneg %p66
        $region14: #{multi_head_attention.1} parent=11 // pred_check_branch
          %172 = sbr.rel (%p170) target = $region16
        $region15: #{multi_head_attention.1} parent=11 // pred_region
          %s174 = ssub.s32 2048, 2048
          %175 = vsyncadd [#allocation6], %s174
          %s176 = sshll.u32 [#allocation5], 4
          %s177 = int_to_ptr.vmem [resolvable:$true] %s176
          %182 = dma.hbm_to_vmem [thread:$0]  %s1, 2048, %s177, [#allocation6], 128, 128, 8
        $region16: #{multi_head_attention.1} parent=11 // pred_fallthru
          _
        // Predicated region
        $region17: #{multi_head_attention.1} parent=11 // pred_check
          %p183 = pneg %p87
        $region18: #{multi_head_attention.1} parent=11 // pred_check_branch
          %185 = sbr.rel (%p183) target = $region20
        $region19: #{multi_head_attention.1} parent=11 // pred_region
          %s187 = ssub.s32 64, 64
          %188 = vsyncadd [#allocation6], %s187
          %s189 = sshll.u32 [#allocation7], 4
          %s190 = int_to_ptr.vmem [resolvable:$true] %s189
          %195 = dma.hbm_to_vmem [thread:$0]  %s2, 64, %s190, [#allocation6], 16, 16, 1
        $region20: #{multi_head_attention.1} parent=11 // pred_fallthru
          _
        // Predicated region
        $region21: #{multi_head_attention.1} parent=11 // pred_check
          %p196 = pneg %p108
        $region22: #{multi_head_attention.1} parent=11 // pred_check_branch
          %198 = sbr.rel (%p196) target = $region24
        $region23: #{multi_head_attention.1} parent=11 // pred_region
          %s200 = ssub.s32 1024, 1024
          %201 = vsyncadd [#allocation9], %s200
          %s202 = sshll.u32 [#allocation8], 4
          %s203 = int_to_ptr.vmem [resolvable:$true] %s202
          %208 = dma.hbm_to_vmem [thread:$0]  %s3, 1024, %s203, [#allocation9], 128, 128, 8
        $region24: #{multi_head_attention.1} parent=11 // pred_fallthru
          _
        // Predicated region
        $region25: #{multi_head_attention.1} parent=11 // pred_check
          %p209 = pneg %p129
        $region26: #{multi_head_attention.1} parent=11 // pred_check_branch
          %211 = sbr.rel (%p209) target = $region28
        $region27: #{multi_head_attention.1} parent=11 // pred_region
          _
        $region28: #{multi_head_attention.1} parent=11 // pred_fallthru
          _
      $region12: #{multi_head_attention.1} parent=5 // pred_fallthru
        _
      %p212 = scmp.lt.s32.totalorder %s19, 2
      // Predicated region
      $region29: #{multi_head_attention.1} parent=5 // pred_check
        %p213 = pneg %p212
      $region30: #{multi_head_attention.1} parent=5 // pred_check_branch
        %215 = sbr.rel (%p213) target = $region32
      $region31: #{multi_head_attention.1} parent=5 // pred_region
        // Predicated region
        $region33: #{multi_head_attention.1} parent=31 // pred_check
          %p216 = pneg %p39
        $region34: #{multi_head_attention.1} parent=31 // pred_check_branch
          %218 = sbr.rel (%p216) target = $region36
        $region35: #{multi_head_attention.1} parent=31 // pred_region
          %s219 = sand.u32 %s29, 1
          %s220 = scalar_lea.sflag [#allocation3], %s219
          %s221 = sand.u32 %s29, 1
          %s222 = smul.addr %s221, 8
          %s223 = scalar_lea.vmem [#allocation2], %s222
          %s225 = ssub.s32 128, 128
          %226 = vsyncadd %s220, %s225
          %s227 = smul.addr %s19, 128
          %s228 = scalar_lea.hbm %s0, %s227
          %s230 = sshll.u32 %s223, 4
          %s231 = int_to_ptr.vmem [resolvable:$true] %s230
          %233 = dma.hbm_to_vmem [thread:$0]  %s228, 128, %s231, %s220
        $region36: #{multi_head_attention.1} parent=31 // pred_fallthru
          _
      $region32: #{multi_head_attention.1} parent=5 // pred_fallthru
        _
      %p234 = scmp.le.s32.totalorder 1, %s19
      %p235 = scmp.lt.s32.totalorder %s19, 3
      %p236 = pnand %p234, %p235
      %p237 = pneg %p236
      // Predicated region
      $region37: #{multi_head_attention.1} parent=5 // pred_check
        _
      $region38: #{multi_head_attention.1} parent=5 // pred_check_branch
        %239 = sbr.rel (%p236) target = $region40
      $region39: #{multi_head_attention.1} parent=5 // pred_region
        %s240 = ssub.s32 %s19, 1
        %s241 = sand.u32 %s32, 1
        %s242 = scalar_lea.sflag [#allocation3], %s241
        %s243 = sand.u32 %s32, 1
        %s244 = smul.addr %s243, 8
        %s245 = scalar_lea.vmem [#allocation2], %s244
        // Predicated region
        $region41: #{multi_head_attention.1} parent=39 // pred_check
          %p246 = pneg %p45
        $region42: #{multi_head_attention.1} parent=39 // pred_check_branch
          %248 = sbr.rel (%p246) target = $region44
        $region43: #{multi_head_attention.1} parent=39 // pred_region
          %249 = dma.done %s242, 128
        $region44: #{multi_head_attention.1} parent=39 // pred_fallthru
          _
        // Predicated region
        $region45: #{multi_head_attention.1} parent=39 // pred_check
          %p250 = pneg %p66
        $region46: #{multi_head_attention.1} parent=39 // pred_check_branch
          %252 = sbr.rel (%p250) target = $region48
        $region47: #{multi_head_attention.1} parent=39 // pred_region
          %253 = dma.done [#allocation6], 2048
        $region48: #{multi_head_attention.1} parent=39 // pred_fallthru
          _
        // Predicated region
        $region49: #{multi_head_attention.1} parent=39 // pred_check
          %p254 = pneg %p87
        $region50: #{multi_head_attention.1} parent=39 // pred_check_branch
          %256 = sbr.rel (%p254) target = $region52
        $region51: #{multi_head_attention.1} parent=39 // pred_region
          %257 = dma.done [#allocation6], 64
        $region52: #{multi_head_attention.1} parent=39 // pred_fallthru
          _
        // Predicated region
        $region53: #{multi_head_attention.1} parent=39 // pred_check
          %p258 = pneg %p108
        $region54: #{multi_head_attention.1} parent=39 // pred_check_branch
          %260 = sbr.rel (%p258) target = $region56
        $region55: #{multi_head_attention.1} parent=39 // pred_region
          %261 = dma.done [#allocation9], 1024
        $region56: #{multi_head_attention.1} parent=39 // pred_fallthru
          _
        %s262 = sand.u32 %s32, 1
        %s263 = scalar_lea.sflag [#allocation3], %s262
        %s264 = sand.u32 %s32, 1
        %s265 = smul.addr %s264, 8
        %s266 = scalar_lea.vmem [#allocation2], %s265
        %p267 = pneg %p45
        %p268 = pneg %p42
        %p269 = pneg %p66
        %p270 = pneg %p63
        %p271 = pneg %p87
        %p272 = pneg %p84
        %p273 = pneg %p108
        %p274 = pneg %p105
        %p275 = pneg %p129
        %p276 = pneg %p126
        %p277 = pneg %p155
        %p278 = pneg %p152
        %s279 = sand.u32 %s142, 1
        %s280 = scalar_lea.sflag [#allocation4], %s279
        %s281 = sand.u32 %s142, 1
        %s282 = smul.addr %s281, 8
        %s283 = scalar_lea.vmem [#allocation10], %s282
        %v284 = vld [vmem:[%s245] sm:$0xff]
        %v285 = vld [vmem:[#allocation5] sm:$0xff]
        %v286 = vld [vmem:[#allocation5 + $0x8] sm:$0xff]
        %v287 = vld [vmem:[#allocation5 + $0x10] sm:$0xff]
        %v288 = vld [vmem:[#allocation5 + $0x18] sm:$0xff]
        %v289 = vld [vmem:[#allocation5 + $0x20] sm:$0xff]
        %v290 = vld [vmem:[#allocation5 + $0x28] sm:$0xff]
        %v291 = vld [vmem:[#allocation5 + $0x30] sm:$0xff]
        %v292 = vld [vmem:[#allocation5 + $0x38] sm:$0xff]
        %v293 = vld [vmem:[#allocation5 + $0x40] sm:$0xff]
        %v294 = vld [vmem:[#allocation5 + $0x48] sm:$0xff]
        %v295 = vld [vmem:[#allocation5 + $0x50] sm:$0xff]
        %v296 = vld [vmem:[#allocation5 + $0x58] sm:$0xff]
        %v297 = vld [vmem:[#allocation5 + $0x60] sm:$0xff]
        %v298 = vld [vmem:[#allocation5 + $0x68] sm:$0xff]
        %v299 = vld [vmem:[#allocation5 + $0x70] sm:$0xff]
        %v300 = vld [vmem:[#allocation5 + $0x78] sm:$0xff]
        %v301 = vld [vmem:[#allocation7] sm:$0x1]
        %v302 = vld [vmem:[#allocation7 + $0x1] sm:$0x1]
        %v303 = vld [vmem:[#allocation7 + $0x2] sm:$0x1]
        %v304 = vld [vmem:[#allocation7 + $0x3] sm:$0x1]
        %v309 = vlaneseq
        %v310 = vshrl.u32 %v309, 7
        %v311 = vsub.s32 0, %v310
        %v312 = vrot.slane %v301, %v311
        %v313 = vlaneseq
        %v314 = vshrl.u32 %v313, 7
        %v315 = vsub.s32 0, %v314
        %v316 = vrot.slane %v302, %v315
        %v317 = vlaneseq
        %v318 = vshrl.u32 %v317, 7
        %v319 = vsub.s32 0, %v318
        %v320 = vrot.slane %v303, %v319
        %v321 = vlaneseq
        %v322 = vshrl.u32 %v321, 7
        %v323 = vsub.s32 0, %v322
        %v324 = vrot.slane %v304, %v323
        %vm329 = vcmask 261120
        %v331 = vsel %vm329, %v284, 0
        %333 = vmatprep.subr.mxu0 0.0
        %334 = vmatpush1.msra.mxu0 0.0
        %335 = vmatprep.subr.mxu0 0.0
        %336 = vmatpush1.msra.mxu0 0.0
        %337 = vmatprep.subr.mxu0 0.0
        %338 = vmatpush1.msra.mxu0 0.0
        %339 = vmatprep.subr.mxu0 0.0
        %340 = vmatpush1.msra.mxu0 0.0
        %341 = vmatprep.subr.mxu0 0.0
        %342 = vmatpush1.msra.mxu0 0.0
        %343 = vmatprep.subr.mxu0 0.0
        %344 = vmatpush1.msra.mxu0 0.0
        %345 = vmatprep.subr.mxu0 0.0
        %346 = vmatpush1.msra.mxu0 0.0
        %347 = vmatprep.subr.mxu0 0.0
        %348 = vmatpush1.msra.mxu0 0.0
        %349 = vmatprep.subr.mxu0 0.0
        %350 = vmatpush1.msra.mxu0 0.0
        %351 = vmatprep.subr.mxu0 0.0
        %352 = vmatpush1.msra.mxu0 0.0
        %353 = vmatprep.subr.mxu0 0.0
        %354 = vmatpush1.msra.mxu0 0.0
        %355 = vmatprep.subr.mxu0 0.0
        %356 = vmatpush1.msra.mxu0 0.0
        %357 = vmatprep.subr.mxu0 0.0
        %358 = vmatpush1.msra.mxu0 %v288
        %359 = vmatprep.subr.mxu0 0.0
        %360 = vmatpush1.msra.mxu0 %v287
        %361 = vmatprep.subr.mxu0 0.0
        %362 = vmatpush1.msra.mxu0 %v286
        %363 = vmatprep.subr.mxu0 0.0
        %364 = vmatpush1.msra.mxu0 %v285
        %365 = vmatprep.subr.mxu0 0.0
        %366 = vmatpush2.msra.mxu0 0.0
        %367 = vmatprep.subr.mxu0 0.0
        %368 = vmatpush2.msra.mxu0 0.0
        %369 = vmatprep.subr.mxu0 0.0
        %370 = vmatpush2.msra.mxu0 0.0
        %371 = vmatprep.subr.mxu0 0.0
        %372 = vmatpush2.msra.mxu0 0.0
        %373 = vmatprep.subr.mxu0 0.0
        %374 = vmatpush2.msra.mxu0 0.0
        %375 = vmatprep.subr.mxu0 0.0
        %376 = vmatpush2.msra.mxu0 0.0
        %377 = vmatprep.subr.mxu0 0.0
        %378 = vmatpush2.msra.mxu0 0.0
        %379 = vmatprep.subr.mxu0 0.0
        %380 = vmatpush2.msra.mxu0 0.0
        %381 = vmatprep.subr.mxu0 0.0
        %382 = vmatpush2.msra.mxu0 0.0
        %383 = vmatprep.subr.mxu0 0.0
        %384 = vmatpush2.msra.mxu0 0.0
        %385 = vmatprep.subr.mxu0 0.0
        %386 = vmatpush2.msra.mxu0 0.0
        %387 = vmatprep.subr.mxu0 0.0
        %388 = vmatpush2.msra.mxu0 0.0
        %389 = vmatprep.subr.mxu0 0.0
        %390 = vmatpush2.msra.mxu0 0.0
        %391 = vmatprep.subr.mxu0 0.0
        %392 = vmatpush2.msra.mxu0 0.0
        %393 = vmatprep.subr.mxu0 0.0
        %394 = vmatpush2.msra.mxu0 0.0
        %395 = vmatprep.subr.mxu0 0.0
        %396 = vmatpush2.msra.mxu0 0.0
        %397 = vmatprep.mubr.f32.mxu0 0.0
        %398 = vmatmul.mubr.f32.gmra.mxu0 %v331
        %v399 = vpop.f32.mrf.mxu0
        %v400 = vadd.f32 %v312, %v399
        %v401 = vpop.f32.mrf.mxu0
        %402 = vdwg.mxu0
        %403 = vmatprep.subr.mxu0 0.0
        %404 = vmatpush1.msra.mxu0 0.0
        %405 = vmatprep.subr.mxu0 0.0
        %406 = vmatpush1.msra.mxu0 0.0
        %407 = vmatprep.subr.mxu0 0.0
        %408 = vmatpush1.msra.mxu0 0.0
        %409 = vmatprep.subr.mxu0 0.0
        %410 = vmatpush1.msra.mxu0 0.0
        %411 = vmatprep.subr.mxu0 0.0
        %412 = vmatpush1.msra.mxu0 0.0
        %413 = vmatprep.subr.mxu0 0.0
        %414 = vmatpush1.msra.mxu0 0.0
        %415 = vmatprep.subr.mxu0 0.0
        %416 = vmatpush1.msra.mxu0 0.0
        %417 = vmatprep.subr.mxu0 0.0
        %418 = vmatpush1.msra.mxu0 0.0
        %419 = vmatprep.subr.mxu0 0.0
        %420 = vmatpush1.msra.mxu0 0.0
        %421 = vmatprep.subr.mxu0 0.0
        %422 = vmatpush1.msra.mxu0 0.0
        %423 = vmatprep.subr.mxu0 0.0
        %424 = vmatpush1.msra.mxu0 0.0
        %425 = vmatprep.subr.mxu0 0.0
        %426 = vmatpush1.msra.mxu0 0.0
        %427 = vmatprep.subr.mxu0 0.0
        %428 = vmatpush1.msra.mxu0 %v292
        %429 = vmatprep.subr.mxu0 0.0
        %430 = vmatpush1.msra.mxu0 %v291
        %431 = vmatprep.subr.mxu0 0.0
        %432 = vmatpush1.msra.mxu0 %v290
        %433 = vmatprep.subr.mxu0 0.0
        %434 = vmatpush1.msra.mxu0 %v289
        %435 = vmatprep.subr.mxu0 0.0
        %436 = vmatpush2.msra.mxu0 0.0
        %437 = vmatprep.subr.mxu0 0.0
        %438 = vmatpush2.msra.mxu0 0.0
        %439 = vmatprep.subr.mxu0 0.0
        %440 = vmatpush2.msra.mxu0 0.0
        %441 = vmatprep.subr.mxu0 0.0
        %442 = vmatpush2.msra.mxu0 0.0
        %443 = vmatprep.subr.mxu0 0.0
        %444 = vmatpush2.msra.mxu0 0.0
        %445 = vmatprep.subr.mxu0 0.0
        %446 = vmatpush2.msra.mxu0 0.0
        %447 = vmatprep.subr.mxu0 0.0
        %448 = vmatpush2.msra.mxu0 0.0
        %449 = vmatprep.subr.mxu0 0.0
        %450 = vmatpush2.msra.mxu0 0.0
        %451 = vmatprep.subr.mxu0 0.0
        %452 = vmatpush2.msra.mxu0 0.0
        %453 = vmatprep.subr.mxu0 0.0
        %454 = vmatpush2.msra.mxu0 0.0
        %455 = vmatprep.subr.mxu0 0.0
        %456 = vmatpush2.msra.mxu0 0.0
        %457 = vmatprep.subr.mxu0 0.0
        %458 = vmatpush2.msra.mxu0 0.0
        %459 = vmatprep.subr.mxu0 0.0
        %460 = vmatpush2.msra.mxu0 0.0
        %461 = vmatprep.subr.mxu0 0.0
        %462 = vmatpush2.msra.mxu0 0.0
        %463 = vmatprep.subr.mxu0 0.0
        %464 = vmatpush2.msra.mxu0 0.0
        %465 = vmatprep.subr.mxu0 0.0
        %466 = vmatpush2.msra.mxu0 0.0
        %467 = vmatprep.mubr.f32.mxu0 0.0
        %468 = vmatmul.mubr.f32.gmra.mxu0 %v331
        %v469 = vpop.f32.mrf.mxu0
        %v470 = vadd.f32 %v316, %v469
        %v471 = vpop.f32.mrf.mxu0
        %472 = vdwg.mxu0
        %473 = vmatprep.subr.mxu0 0.0
        %474 = vmatpush1.msra.mxu0 0.0
        %475 = vmatprep.subr.mxu0 0.0
        %476 = vmatpush1.msra.mxu0 0.0
        %477 = vmatprep.subr.mxu0 0.0
        %478 = vmatpush1.msra.mxu0 0.0
        %479 = vmatprep.subr.mxu0 0.0
        %480 = vmatpush1.msra.mxu0 0.0
        %481 = vmatprep.subr.mxu0 0.0
        %482 = vmatpush1.msra.mxu0 0.0
        %483 = vmatprep.subr.mxu0 0.0
        %484 = vmatpush1.msra.mxu0 0.0
        %485 = vmatprep.subr.mxu0 0.0
        %486 = vmatpush1.msra.mxu0 0.0
        %487 = vmatprep.subr.mxu0 0.0
        %488 = vmatpush1.msra.mxu0 0.0
        %489 = vmatprep.subr.mxu0 0.0
        %490 = vmatpush1.msra.mxu0 0.0
        %491 = vmatprep.subr.mxu0 0.0
        %492 = vmatpush1.msra.mxu0 0.0
        %493 = vmatprep.subr.mxu0 0.0
        %494 = vmatpush1.msra.mxu0 0.0
        %495 = vmatprep.subr.mxu0 0.0
        %496 = vmatpush1.msra.mxu0 0.0
        %497 = vmatprep.subr.mxu0 0.0
        %498 = vmatpush1.msra.mxu0 %v296
        %499 = vmatprep.subr.mxu0 0.0
        %500 = vmatpush1.msra.mxu0 %v295
        %501 = vmatprep.subr.mxu0 0.0
        %502 = vmatpush1.msra.mxu0 %v294
        %503 = vmatprep.subr.mxu0 0.0
        %504 = vmatpush1.msra.mxu0 %v293
        %505 = vmatprep.subr.mxu0 0.0
        %506 = vmatpush2.msra.mxu0 0.0
        %507 = vmatprep.subr.mxu0 0.0
        %508 = vmatpush2.msra.mxu0 0.0
        %509 = vmatprep.subr.mxu0 0.0
        %510 = vmatpush2.msra.mxu0 0.0
        %511 = vmatprep.subr.mxu0 0.0
        %512 = vmatpush2.msra.mxu0 0.0
        %513 = vmatprep.subr.mxu0 0.0
        %514 = vmatpush2.msra.mxu0 0.0
        %515 = vmatprep.subr.mxu0 0.0
        %516 = vmatpush2.msra.mxu0 0.0
        %517 = vmatprep.subr.mxu0 0.0
        %518 = vmatpush2.msra.mxu0 0.0
        %519 = vmatprep.subr.mxu0 0.0
        %520 = vmatpush2.msra.mxu0 0.0
        %521 = vmatprep.subr.mxu0 0.0
        %522 = vmatpush2.msra.mxu0 0.0
        %523 = vmatprep.subr.mxu0 0.0
        %524 = vmatpush2.msra.mxu0 0.0
        %525 = vmatprep.subr.mxu0 0.0
        %526 = vmatpush2.msra.mxu0 0.0
        %527 = vmatprep.subr.mxu0 0.0
        %528 = vmatpush2.msra.mxu0 0.0
        %529 = vmatprep.subr.mxu0 0.0
        %530 = vmatpush2.msra.mxu0 0.0
        %531 = vmatprep.subr.mxu0 0.0
        %532 = vmatpush2.msra.mxu0 0.0
        %533 = vmatprep.subr.mxu0 0.0
        %534 = vmatpush2.msra.mxu0 0.0
        %535 = vmatprep.subr.mxu0 0.0
        %536 = vmatpush2.msra.mxu0 0.0
        %537 = vmatprep.mubr.f32.mxu0 0.0
        %538 = vmatmul.mubr.f32.gmra.mxu0 %v331
        %v539 = vpop.f32.mrf.mxu0
        %v540 = vadd.f32 %v320, %v539
        %v541 = vpop.f32.mrf.mxu0
        %542 = vdwg.mxu0
        %543 = vmatprep.subr.mxu0 0.0
        %544 = vmatpush1.msra.mxu0 0.0
        %545 = vmatprep.subr.mxu0 0.0
        %546 = vmatpush1.msra.mxu0 0.0
        %547 = vmatprep.subr.mxu0 0.0
        %548 = vmatpush1.msra.mxu0 0.0
        %549 = vmatprep.subr.mxu0 0.0
        %550 = vmatpush1.msra.mxu0 0.0
        %551 = vmatprep.subr.mxu0 0.0
        %552 = vmatpush1.msra.mxu0 0.0
        %553 = vmatprep.subr.mxu0 0.0
        %554 = vmatpush1.msra.mxu0 0.0
        %555 = vmatprep.subr.mxu0 0.0
        %556 = vmatpush1.msra.mxu0 0.0
        %557 = vmatprep.subr.mxu0 0.0
        %558 = vmatpush1.msra.mxu0 0.0
        %559 = vmatprep.subr.mxu0 0.0
        %560 = vmatpush1.msra.mxu0 0.0
        %561 = vmatprep.subr.mxu0 0.0
        %562 = vmatpush1.msra.mxu0 0.0
        %563 = vmatprep.subr.mxu0 0.0
        %564 = vmatpush1.msra.mxu0 0.0
        %565 = vmatprep.subr.mxu0 0.0
        %566 = vmatpush1.msra.mxu0 0.0
        %567 = vmatprep.subr.mxu0 0.0
        %568 = vmatpush1.msra.mxu0 %v300
        %569 = vmatprep.subr.mxu0 0.0
        %570 = vmatpush1.msra.mxu0 %v299
        %571 = vmatprep.subr.mxu0 0.0
        %572 = vmatpush1.msra.mxu0 %v298
        %573 = vmatprep.subr.mxu0 0.0
        %574 = vmatpush1.msra.mxu0 %v297
        %575 = vmatprep.subr.mxu0 0.0
        %576 = vmatpush2.msra.mxu0 0.0
        %577 = vmatprep.subr.mxu0 0.0
        %578 = vmatpush2.msra.mxu0 0.0
        %579 = vmatprep.subr.mxu0 0.0
        %580 = vmatpush2.msra.mxu0 0.0
        %581 = vmatprep.subr.mxu0 0.0
        %582 = vmatpush2.msra.mxu0 0.0
        %583 = vmatprep.subr.mxu0 0.0
        %584 = vmatpush2.msra.mxu0 0.0
        %585 = vmatprep.subr.mxu0 0.0
        %586 = vmatpush2.msra.mxu0 0.0
        %587 = vmatprep.subr.mxu0 0.0
        %588 = vmatpush2.msra.mxu0 0.0
        %589 = vmatprep.subr.mxu0 0.0
        %590 = vmatpush2.msra.mxu0 0.0
        %591 = vmatprep.subr.mxu0 0.0
        %592 = vmatpush2.msra.mxu0 0.0
        %593 = vmatprep.subr.mxu0 0.0
        %594 = vmatpush2.msra.mxu0 0.0
        %595 = vmatprep.subr.mxu0 0.0
        %596 = vmatpush2.msra.mxu0 0.0
        %597 = vmatprep.subr.mxu0 0.0
        %598 = vmatpush2.msra.mxu0 0.0
        %599 = vmatprep.subr.mxu0 0.0
        %600 = vmatpush2.msra.mxu0 0.0
        %601 = vmatprep.subr.mxu0 0.0
        %602 = vmatpush2.msra.mxu0 0.0
        %603 = vmatprep.subr.mxu0 0.0
        %604 = vmatpush2.msra.mxu0 0.0
        %605 = vmatprep.subr.mxu0 0.0
        %606 = vmatpush2.msra.mxu0 0.0
        %607 = vmatprep.mubr.f32.mxu0 0.0
        %608 = vmatmul.mubr.f32.gmra.mxu0 %v331
        %v609 = vpop.f32.mrf.mxu0
        %v610 = vadd.f32 %v324, %v609
        %v611 = vpop.f32.mrf.mxu0
        %612 = vdwg.mxu0
        %v613 = vlaneseq
        %v614 = vshrl.u32 %v613, 7
        %v615 = vlaneseq
        %v616 = vand.u32 %v615, 127
        %vm617 = vcmp.ge.s32.totalorder %v614, %v616
        %619 = vrot.lane.b32.xlu0 %v400, 112
        %v620 = vpop.permute.xlu0 %619
        %vm621 = vcmask 130048
        %v622 = vsel %vm621, %v400, 0
        %v624 = vsel %vm621, %v620, 0
        %626 = vmatprep.subr.mxu0 0.0
        %627 = vmatpush1.xpose.msra.mxu0 0.0
        %628 = vmatprep.subr.mxu0 0.0
        %629 = vmatpush1.xpose.msra.mxu0 0.0
        %630 = vmatprep.subr.mxu0 0.0
        %631 = vmatpush1.xpose.msra.mxu0 0.0
        %632 = vmatprep.subr.mxu0 0.0
        %633 = vmatpush1.xpose.msra.mxu0 0.0
        %634 = vmatprep.subr.mxu0 0.0
        %635 = vmatpush1.xpose.msra.mxu0 0.0
        %636 = vmatprep.subr.mxu0 0.0
        %637 = vmatpush1.xpose.msra.mxu0 0.0
        %638 = vmatprep.subr.mxu0 0.0
        %639 = vmatpush1.xpose.msra.mxu0 0.0
        %640 = vmatprep.subr.mxu0 0.0
        %641 = vmatpush1.xpose.msra.mxu0 0.0
        %642 = vmatprep.subr.mxu0 0.0
        %643 = vmatpush1.xpose.msra.mxu0 0.0
        %644 = vmatprep.subr.mxu0 0.0
        %645 = vmatpush1.xpose.msra.mxu0 0.0
        %646 = vmatprep.subr.mxu0 0.0
        %647 = vmatpush1.xpose.msra.mxu0 0.0
        %648 = vmatprep.subr.mxu0 0.0
        %649 = vmatpush1.xpose.msra.mxu0 0.0
        %650 = vmatprep.subr.mxu0 0.0
        %651 = vmatpush1.xpose.msra.mxu0 0.0
        %652 = vmatprep.subr.mxu0 0.0
        %653 = vmatpush1.xpose.msra.mxu0 0.0
        %654 = vmatprep.subr.mxu0 0.0
        %655 = vmatpush1.xpose.msra.mxu0 0.0
        %656 = vmatprep.subr.mxu0 0.0
        %657 = vmatpush1.xpose.msra.mxu0 %v624
        %658 = vmatprep.subr.mxu0 0.0
        %659 = vmatpush2.xpose.msra.mxu0 0.0
        %660 = vmatprep.subr.mxu0 0.0
        %661 = vmatpush2.xpose.msra.mxu0 0.0
        %662 = vmatprep.subr.mxu0 0.0
        %663 = vmatpush2.xpose.msra.mxu0 0.0
        %664 = vmatprep.subr.mxu0 0.0
        %665 = vmatpush2.xpose.msra.mxu0 0.0
        %666 = vmatprep.subr.mxu0 0.0
        %667 = vmatpush2.xpose.msra.mxu0 0.0
        %668 = vmatprep.subr.mxu0 0.0
        %669 = vmatpush2.xpose.msra.mxu0 0.0
        %670 = vmatprep.subr.mxu0 0.0
        %671 = vmatpush2.xpose.msra.mxu0 0.0
        %672 = vmatprep.subr.mxu0 0.0
        %673 = vmatpush2.xpose.msra.mxu0 0.0
        %674 = vmatprep.subr.mxu0 0.0
        %675 = vmatpush2.xpose.msra.mxu0 0.0
        %676 = vmatprep.subr.mxu0 0.0
        %677 = vmatpush2.xpose.msra.mxu0 0.0
        %678 = vmatprep.subr.mxu0 0.0
        %679 = vmatpush2.xpose.msra.mxu0 0.0
        %680 = vmatprep.subr.mxu0 0.0
        %681 = vmatpush2.xpose.msra.mxu0 0.0
        %682 = vmatprep.subr.mxu0 0.0
        %683 = vmatpush2.xpose.msra.mxu0 0.0
        %684 = vmatprep.subr.mxu0 0.0
        %685 = vmatpush2.xpose.msra.mxu0 0.0
        %686 = vmatprep.subr.mxu0 0.0
        %687 = vmatpush2.xpose.msra.mxu0 0.0
        %688 = vmatprep.subr.mxu0 0.0
        %689 = vmatpush2.xpose.msra.mxu0 0.0
        %690 = vmatprep.mubr.f32.mxu0 0.0
        %691 = vmatmul.mubr.f32.gmra.mxu0 %v622
        %v692 = vpop.f32.mrf.mxu0
        %v693 = vadd.f32 0.0, %v692
        %v694 = vpop.f32.mrf.mxu0
        %695 = vdwg.mxu0
        %697 = vrot.lane.b32.xlu0 %v470, 112
        %v698 = vpop.permute.xlu0 %697
        %v699 = vsel %vm621, %v470, 0
        %v701 = vsel %vm621, %v698, 0
        %703 = vmatprep.subr.mxu0 0.0
        %704 = vmatpush1.xpose.msra.mxu0 0.0
        %705 = vmatprep.subr.mxu0 0.0
        %706 = vmatpush1.xpose.msra.mxu0 0.0
        %707 = vmatprep.subr.mxu0 0.0
        %708 = vmatpush1.xpose.msra.mxu0 0.0
        %709 = vmatprep.subr.mxu0 0.0
        %710 = vmatpush1.xpose.msra.mxu0 0.0
        %711 = vmatprep.subr.mxu0 0.0
        %712 = vmatpush1.xpose.msra.mxu0 0.0
        %713 = vmatprep.subr.mxu0 0.0
        %714 = vmatpush1.xpose.msra.mxu0 0.0
        %715 = vmatprep.subr.mxu0 0.0
        %716 = vmatpush1.xpose.msra.mxu0 0.0
        %717 = vmatprep.subr.mxu0 0.0
        %718 = vmatpush1.xpose.msra.mxu0 0.0
        %719 = vmatprep.subr.mxu0 0.0
        %720 = vmatpush1.xpose.msra.mxu0 0.0
        %721 = vmatprep.subr.mxu0 0.0
        %722 = vmatpush1.xpose.msra.mxu0 0.0
        %723 = vmatprep.subr.mxu0 0.0
        %724 = vmatpush1.xpose.msra.mxu0 0.0
        %725 = vmatprep.subr.mxu0 0.0
        %726 = vmatpush1.xpose.msra.mxu0 0.0
        %727 = vmatprep.subr.mxu0 0.0
        %728 = vmatpush1.xpose.msra.mxu0 0.0
        %729 = vmatprep.subr.mxu0 0.0
        %730 = vmatpush1.xpose.msra.mxu0 0.0
        %731 = vmatprep.subr.mxu0 0.0
        %732 = vmatpush1.xpose.msra.mxu0 0.0
        %733 = vmatprep.subr.mxu0 0.0
        %734 = vmatpush1.xpose.msra.mxu0 %v701
        %735 = vmatprep.subr.mxu0 0.0
        %736 = vmatpush2.xpose.msra.mxu0 0.0
        %737 = vmatprep.subr.mxu0 0.0
        %738 = vmatpush2.xpose.msra.mxu0 0.0
        %739 = vmatprep.subr.mxu0 0.0
        %740 = vmatpush2.xpose.msra.mxu0 0.0
        %741 = vmatprep.subr.mxu0 0.0
        %742 = vmatpush2.xpose.msra.mxu0 0.0
        %743 = vmatprep.subr.mxu0 0.0
        %744 = vmatpush2.xpose.msra.mxu0 0.0
        %745 = vmatprep.subr.mxu0 0.0
        %746 = vmatpush2.xpose.msra.mxu0 0.0
        %747 = vmatprep.subr.mxu0 0.0
        %748 = vmatpush2.xpose.msra.mxu0 0.0
        %749 = vmatprep.subr.mxu0 0.0
        %750 = vmatpush2.xpose.msra.mxu0 0.0
        %751 = vmatprep.subr.mxu0 0.0
        %752 = vmatpush2.xpose.msra.mxu0 0.0
        %753 = vmatprep.subr.mxu0 0.0
        %754 = vmatpush2.xpose.msra.mxu0 0.0
        %755 = vmatprep.subr.mxu0 0.0
        %756 = vmatpush2.xpose.msra.mxu0 0.0
        %757 = vmatprep.subr.mxu0 0.0
        %758 = vmatpush2.xpose.msra.mxu0 0.0
        %759 = vmatprep.subr.mxu0 0.0
        %760 = vmatpush2.xpose.msra.mxu0 0.0
        %761 = vmatprep.subr.mxu0 0.0
        %762 = vmatpush2.xpose.msra.mxu0 0.0
        %763 = vmatprep.subr.mxu0 0.0
        %764 = vmatpush2.xpose.msra.mxu0 0.0
        %765 = vmatprep.subr.mxu0 0.0
        %766 = vmatpush2.xpose.msra.mxu0 0.0
        %767 = vmatprep.mubr.f32.mxu0 0.0
        %768 = vmatmul.mubr.f32.gmra.mxu0 %v699
        %v769 = vpop.f32.mrf.mxu0
        %v770 = vadd.f32 0.0, %v769
        %v771 = vpop.f32.mrf.mxu0
        %772 = vdwg.mxu0
        %774 = vrot.lane.b32.xlu0 %v540, 112
        %v775 = vpop.permute.xlu0 %774
        %v776 = vsel %vm621, %v540, 0
        %v778 = vsel %vm621, %v775, 0
        %780 = vmatprep.subr.mxu0 0.0
        %781 = vmatpush1.xpose.msra.mxu0 0.0
        %782 = vmatprep.subr.mxu0 0.0
        %783 = vmatpush1.xpose.msra.mxu0 0.0
        %784 = vmatprep.subr.mxu0 0.0
        %785 = vmatpush1.xpose.msra.mxu0 0.0
        %786 = vmatprep.subr.mxu0 0.0
        %787 = vmatpush1.xpose.msra.mxu0 0.0
        %788 = vmatprep.subr.mxu0 0.0
        %789 = vmatpush1.xpose.msra.mxu0 0.0
        %790 = vmatprep.subr.mxu0 0.0
        %791 = vmatpush1.xpose.msra.mxu0 0.0
        %792 = vmatprep.subr.mxu0 0.0
        %793 = vmatpush1.xpose.msra.mxu0 0.0
        %794 = vmatprep.subr.mxu0 0.0
        %795 = vmatpush1.xpose.msra.mxu0 0.0
        %796 = vmatprep.subr.mxu0 0.0
        %797 = vmatpush1.xpose.msra.mxu0 0.0
        %798 = vmatprep.subr.mxu0 0.0
        %799 = vmatpush1.xpose.msra.mxu0 0.0
        %800 = vmatprep.subr.mxu0 0.0
        %801 = vmatpush1.xpose.msra.mxu0 0.0
        %802 = vmatprep.subr.mxu0 0.0
        %803 = vmatpush1.xpose.msra.mxu0 0.0
        %804 = vmatprep.subr.mxu0 0.0
        %805 = vmatpush1.xpose.msra.mxu0 0.0
        %806 = vmatprep.subr.mxu0 0.0
        %807 = vmatpush1.xpose.msra.mxu0 0.0
        %808 = vmatprep.subr.mxu0 0.0
        %809 = vmatpush1.xpose.msra.mxu0 0.0
        %810 = vmatprep.subr.mxu0 0.0
        %811 = vmatpush1.xpose.msra.mxu0 %v778
        %812 = vmatprep.subr.mxu0 0.0
        %813 = vmatpush2.xpose.msra.mxu0 0.0
        %814 = vmatprep.subr.mxu0 0.0
        %815 = vmatpush2.xpose.msra.mxu0 0.0
        %816 = vmatprep.subr.mxu0 0.0
        %817 = vmatpush2.xpose.msra.mxu0 0.0
        %818 = vmatprep.subr.mxu0 0.0
        %819 = vmatpush2.xpose.msra.mxu0 0.0
        %820 = vmatprep.subr.mxu0 0.0
        %821 = vmatpush2.xpose.msra.mxu0 0.0
        %822 = vmatprep.subr.mxu0 0.0
        %823 = vmatpush2.xpose.msra.mxu0 0.0
        %824 = vmatprep.subr.mxu0 0.0
        %825 = vmatpush2.xpose.msra.mxu0 0.0
        %826 = vmatprep.subr.mxu0 0.0
        %827 = vmatpush2.xpose.msra.mxu0 0.0
        %828 = vmatprep.subr.mxu0 0.0
        %829 = vmatpush2.xpose.msra.mxu0 0.0
        %830 = vmatprep.subr.mxu0 0.0
        %831 = vmatpush2.xpose.msra.mxu0 0.0
        %832 = vmatprep.subr.mxu0 0.0
        %833 = vmatpush2.xpose.msra.mxu0 0.0
        %834 = vmatprep.subr.mxu0 0.0
        %835 = vmatpush2.xpose.msra.mxu0 0.0
        %836 = vmatprep.subr.mxu0 0.0
        %837 = vmatpush2.xpose.msra.mxu0 0.0
        %838 = vmatprep.subr.mxu0 0.0
        %839 = vmatpush2.xpose.msra.mxu0 0.0
        %840 = vmatprep.subr.mxu0 0.0
        %841 = vmatpush2.xpose.msra.mxu0 0.0
        %842 = vmatprep.subr.mxu0 0.0
        %843 = vmatpush2.xpose.msra.mxu0 0.0
        %844 = vmatprep.mubr.f32.mxu0 0.0
        %845 = vmatmul.mubr.f32.gmra.mxu0 %v776
        %v846 = vpop.f32.mrf.mxu0
        %v847 = vadd.f32 0.0, %v846
        %v848 = vpop.f32.mrf.mxu0
        %849 = vdwg.mxu0
        %851 = vrot.lane.b32.xlu0 %v610, 112
        %v852 = vpop.permute.xlu0 %851
        %v853 = vsel %vm621, %v610, 0
        %v855 = vsel %vm621, %v852, 0
        %857 = vmatprep.subr.mxu0 0.0
        %858 = vmatpush1.xpose.msra.mxu0 0.0
        %859 = vmatprep.subr.mxu0 0.0
        %860 = vmatpush1.xpose.msra.mxu0 0.0
        %861 = vmatprep.subr.mxu0 0.0
        %862 = vmatpush1.xpose.msra.mxu0 0.0
        %863 = vmatprep.subr.mxu0 0.0
        %864 = vmatpush1.xpose.msra.mxu0 0.0
        %865 = vmatprep.subr.mxu0 0.0
        %866 = vmatpush1.xpose.msra.mxu0 0.0
        %867 = vmatprep.subr.mxu0 0.0
        %868 = vmatpush1.xpose.msra.mxu0 0.0
        %869 = vmatprep.subr.mxu0 0.0
        %870 = vmatpush1.xpose.msra.mxu0 0.0
        %871 = vmatprep.subr.mxu0 0.0
        %872 = vmatpush1.xpose.msra.mxu0 0.0
        %873 = vmatprep.subr.mxu0 0.0
        %874 = vmatpush1.xpose.msra.mxu0 0.0
        %875 = vmatprep.subr.mxu0 0.0
        %876 = vmatpush1.xpose.msra.mxu0 0.0
        %877 = vmatprep.subr.mxu0 0.0
        %878 = vmatpush1.xpose.msra.mxu0 0.0
        %879 = vmatprep.subr.mxu0 0.0
        %880 = vmatpush1.xpose.msra.mxu0 0.0
        %881 = vmatprep.subr.mxu0 0.0
        %882 = vmatpush1.xpose.msra.mxu0 0.0
        %883 = vmatprep.subr.mxu0 0.0
        %884 = vmatpush1.xpose.msra.mxu0 0.0
        %885 = vmatprep.subr.mxu0 0.0
        %886 = vmatpush1.xpose.msra.mxu0 0.0
        %887 = vmatprep.subr.mxu0 0.0
        %888 = vmatpush1.xpose.msra.mxu0 %v855
        %889 = vmatprep.subr.mxu0 0.0
        %890 = vmatpush2.xpose.msra.mxu0 0.0
        %891 = vmatprep.subr.mxu0 0.0
        %892 = vmatpush2.xpose.msra.mxu0 0.0
        %893 = vmatprep.subr.mxu0 0.0
        %894 = vmatpush2.xpose.msra.mxu0 0.0
        %895 = vmatprep.subr.mxu0 0.0
        %896 = vmatpush2.xpose.msra.mxu0 0.0
        %897 = vmatprep.subr.mxu0 0.0
        %898 = vmatpush2.xpose.msra.mxu0 0.0
        %899 = vmatprep.subr.mxu0 0.0
        %900 = vmatpush2.xpose.msra.mxu0 0.0
        %901 = vmatprep.subr.mxu0 0.0
        %902 = vmatpush2.xpose.msra.mxu0 0.0
        %903 = vmatprep.subr.mxu0 0.0
        %904 = vmatpush2.xpose.msra.mxu0 0.0
        %905 = vmatprep.subr.mxu0 0.0
        %906 = vmatpush2.xpose.msra.mxu0 0.0
        %907 = vmatprep.subr.mxu0 0.0
        %908 = vmatpush2.xpose.msra.mxu0 0.0
        %909 = vmatprep.subr.mxu0 0.0
        %910 = vmatpush2.xpose.msra.mxu0 0.0
        %911 = vmatprep.subr.mxu0 0.0
        %912 = vmatpush2.xpose.msra.mxu0 0.0
        %913 = vmatprep.subr.mxu0 0.0
        %914 = vmatpush2.xpose.msra.mxu0 0.0
        %915 = vmatprep.subr.mxu0 0.0
        %916 = vmatpush2.xpose.msra.mxu0 0.0
        %917 = vmatprep.subr.mxu0 0.0
        %918 = vmatpush2.xpose.msra.mxu0 0.0
        %919 = vmatprep.subr.mxu0 0.0
        %920 = vmatpush2.xpose.msra.mxu0 0.0
        %921 = vmatprep.mubr.f32.mxu0 0.0
        %922 = vmatmul.mubr.f32.gmra.mxu0 %v853
        %v923 = vpop.f32.mrf.mxu0
        %v924 = vadd.f32 0.0, %v923
        %v925 = vpop.f32.mrf.mxu0
        %926 = vdwg.mxu0
        %v927 = vsel %vm617, 1, 0
        %vm928 = vcmp.eq.s32.totalorder %v927, 1
        %v929 = vsel %vm928, %v693, -1e+30
        %v930 = vsel %vm928, %v770, -1e+30
        %v931 = vsel %vm928, %v847, -1e+30
        %v932 = vsel %vm928, %v924, -1e+30
        %vm933 = vcmask 64512
        %v934 = vsel %vm933, %v929, -inf
        %935 = vmax.xlane.f32.xlu0 %v934
        %v936 = vpop.xlane.xlu0 %935
        %v937 = vsel %vm933, %v930, -inf
        %938 = vmax.xlane.f32.xlu0 %v937
        %v939 = vpop.xlane.xlu0 %938
        %v940 = vsel %vm933, %v931, -inf
        %941 = vmax.xlane.f32.xlu0 %v940
        %v942 = vpop.xlane.xlu0 %941
        %v943 = vsel %vm933, %v932, -inf
        %944 = vmax.xlane.f32.xlu0 %v943
        %v945 = vpop.xlane.xlu0 %944
        %v946 = vsub.f32 %v929, %v936
        %v947 = vsub.f32 %v930, %v939
        %v948 = vsub.f32 %v931, %v942
        %v949 = vsub.f32 %v932, %v945
        %v950 = vmul.f32 %v946, 1.442695
        %v951 = vpow.pop %v950
        %v952 = vmul.f32 %v947, 1.442695
        %v953 = vpow.pop %v952
        %v954 = vmul.f32 %v948, 1.442695
        %v955 = vpow.pop %v954
        %v956 = vmul.f32 %v949, 1.442695
        %v957 = vpow.pop %v956
        %v958 = vsel %vm933, %v951, 0.0
        %959 = vadd.xlane.f32.xlu0 %v958
        %v960 = vpop.xlane.xlu0 %959
        %v961 = vsel %vm933, %v953, 0.0
        %962 = vadd.xlane.f32.xlu0 %v961
        %v963 = vpop.xlane.xlu0 %962
        %v964 = vsel %vm933, %v955, 0.0
        %965 = vadd.xlane.f32.xlu0 %v964
        %v966 = vpop.xlane.xlu0 %965
        %v967 = vsel %vm933, %v957, 0.0
        %968 = vadd.xlane.f32.xlu0 %v967
        %v969 = vpop.xlane.xlu0 %968
        %v970 = vrcp.pop %v960
        %v971 = vrcp.pop %v963
        %v972 = vrcp.pop %v966
        %v973 = vrcp.pop %v969
        %v974 = vmul.f32 %v951, %v970
        %v975 = vmul.f32 %v953, %v971
        %v976 = vmul.f32 %v955, %v972
        %v977 = vmul.f32 %v957, %v973
        %978 = vrot.lane.b32.xlu0 %v400, 96
        %v979 = vpop.permute.xlu0 %978
        %v982 = vsel %vm933, %v974, 0
        %984 = vmatprep.subr.mxu0 0.0
        %985 = vmatpush1.msra.mxu0 0.0
        %986 = vmatprep.subr.mxu0 0.0
        %987 = vmatpush1.msra.mxu0 0.0
        %988 = vmatprep.subr.mxu0 0.0
        %989 = vmatpush1.msra.mxu0 0.0
        %990 = vmatprep.subr.mxu0 0.0
        %991 = vmatpush1.msra.mxu0 0.0
        %992 = vmatprep.subr.mxu0 0.0
        %993 = vmatpush1.msra.mxu0 0.0
        %994 = vmatprep.subr.mxu0 0.0
        %995 = vmatpush1.msra.mxu0 0.0
        %996 = vmatprep.subr.mxu0 0.0
        %997 = vmatpush1.msra.mxu0 0.0
        %998 = vmatprep.subr.mxu0 0.0
        %999 = vmatpush1.msra.mxu0 0.0
        %1000 = vmatprep.subr.mxu0 0.0
        %1001 = vmatpush1.msra.mxu0 0.0
        %1002 = vmatprep.subr.mxu0 0.0
        %1003 = vmatpush1.msra.mxu0 0.0
        %1004 = vmatprep.subr.mxu0 0.0
        %1005 = vmatpush1.msra.mxu0 0.0
        %1006 = vmatprep.subr.mxu0 0.0
        %1007 = vmatpush1.msra.mxu0 0.0
        %1008 = vmatprep.subr.mxu0 0.0
        %1009 = vmatpush1.msra.mxu0 0.0
        %1010 = vmatprep.subr.mxu0 0.0
        %1011 = vmatpush1.msra.mxu0 0.0
        %1012 = vmatprep.subr.mxu0 0.0
        %1013 = vmatpush1.msra.mxu0 0.0
        %1014 = vmatprep.subr.mxu0 0.0
        %1015 = vmatpush1.msra.mxu0 %v979
        %1016 = vmatprep.subr.mxu0 0.0
        %1017 = vmatpush2.msra.mxu0 0.0
        %1018 = vmatprep.subr.mxu0 0.0
        %1019 = vmatpush2.msra.mxu0 0.0
        %1020 = vmatprep.subr.mxu0 0.0
        %1021 = vmatpush2.msra.mxu0 0.0
        %1022 = vmatprep.subr.mxu0 0.0
        %1023 = vmatpush2.msra.mxu0 0.0
        %1024 = vmatprep.subr.mxu0 0.0
        %1025 = vmatpush2.msra.mxu0 0.0
        %1026 = vmatprep.subr.mxu0 0.0
        %1027 = vmatpush2.msra.mxu0 0.0
        %1028 = vmatprep.subr.mxu0 0.0
        %1029 = vmatpush2.msra.mxu0 0.0
        %1030 = vmatprep.subr.mxu0 0.0
        %1031 = vmatpush2.msra.mxu0 0.0
        %1032 = vmatprep.subr.mxu0 0.0
        %1033 = vmatpush2.msra.mxu0 0.0
        %1034 = vmatprep.subr.mxu0 0.0
        %1035 = vmatpush2.msra.mxu0 0.0
        %1036 = vmatprep.subr.mxu0 0.0
        %1037 = vmatpush2.msra.mxu0 0.0
        %1038 = vmatprep.subr.mxu0 0.0
        %1039 = vmatpush2.msra.mxu0 0.0
        %1040 = vmatprep.subr.mxu0 0.0
        %1041 = vmatpush2.msra.mxu0 0.0
        %1042 = vmatprep.subr.mxu0 0.0
        %1043 = vmatpush2.msra.mxu0 0.0
        %1044 = vmatprep.subr.mxu0 0.0
        %1045 = vmatpush2.msra.mxu0 0.0
        %1046 = vmatprep.subr.mxu0 0.0
        %1047 = vmatpush2.msra.mxu0 0.0
        %1048 = vmatprep.mubr.f32.mxu0 0.0
        %1049 = vmatmul.mubr.f32.gmra.mxu0 %v982
        %v1050 = vpop.f32.mrf.mxu0
        %v1051 = vadd.f32 0.0, %v1050
        %v1052 = vpop.f32.mrf.mxu0
        %1053 = vdwg.mxu0
        %1054 = vrot.lane.b32.xlu0 %v470, 96
        %v1055 = vpop.permute.xlu0 %1054
        %v1058 = vsel %vm933, %v975, 0
        %1060 = vmatprep.subr.mxu0 0.0
        %1061 = vmatpush1.msra.mxu0 0.0
        %1062 = vmatprep.subr.mxu0 0.0
        %1063 = vmatpush1.msra.mxu0 0.0
        %1064 = vmatprep.subr.mxu0 0.0
        %1065 = vmatpush1.msra.mxu0 0.0
        %1066 = vmatprep.subr.mxu0 0.0
        %1067 = vmatpush1.msra.mxu0 0.0
        %1068 = vmatprep.subr.mxu0 0.0
        %1069 = vmatpush1.msra.mxu0 0.0
        %1070 = vmatprep.subr.mxu0 0.0
        %1071 = vmatpush1.msra.mxu0 0.0
        %1072 = vmatprep.subr.mxu0 0.0
        %1073 = vmatpush1.msra.mxu0 0.0
        %1074 = vmatprep.subr.mxu0 0.0
        %1075 = vmatpush1.msra.mxu0 0.0
        %1076 = vmatprep.subr.mxu0 0.0
        %1077 = vmatpush1.msra.mxu0 0.0
        %1078 = vmatprep.subr.mxu0 0.0
        %1079 = vmatpush1.msra.mxu0 0.0
        %1080 = vmatprep.subr.mxu0 0.0
        %1081 = vmatpush1.msra.mxu0 0.0
        %1082 = vmatprep.subr.mxu0 0.0
        %1083 = vmatpush1.msra.mxu0 0.0
        %1084 = vmatprep.subr.mxu0 0.0
        %1085 = vmatpush1.msra.mxu0 0.0
        %1086 = vmatprep.subr.mxu0 0.0
        %1087 = vmatpush1.msra.mxu0 0.0
        %1088 = vmatprep.subr.mxu0 0.0
        %1089 = vmatpush1.msra.mxu0 0.0
        %1090 = vmatprep.subr.mxu0 0.0
        %1091 = vmatpush1.msra.mxu0 %v1055
        %1092 = vmatprep.subr.mxu0 0.0
        %1093 = vmatpush2.msra.mxu0 0.0
        %1094 = vmatprep.subr.mxu0 0.0
        %1095 = vmatpush2.msra.mxu0 0.0
        %1096 = vmatprep.subr.mxu0 0.0
        %1097 = vmatpush2.msra.mxu0 0.0
        %1098 = vmatprep.subr.mxu0 0.0
        %1099 = vmatpush2.msra.mxu0 0.0
        %1100 = vmatprep.subr.mxu0 0.0
        %1101 = vmatpush2.msra.mxu0 0.0
        %1102 = vmatprep.subr.mxu0 0.0
        %1103 = vmatpush2.msra.mxu0 0.0
        %1104 = vmatprep.subr.mxu0 0.0
        %1105 = vmatpush2.msra.mxu0 0.0
        %1106 = vmatprep.subr.mxu0 0.0
        %1107 = vmatpush2.msra.mxu0 0.0
        %1108 = vmatprep.subr.mxu0 0.0
        %1109 = vmatpush2.msra.mxu0 0.0
        %1110 = vmatprep.subr.mxu0 0.0
        %1111 = vmatpush2.msra.mxu0 0.0
        %1112 = vmatprep.subr.mxu0 0.0
        %1113 = vmatpush2.msra.mxu0 0.0
        %1114 = vmatprep.subr.mxu0 0.0
        %1115 = vmatpush2.msra.mxu0 0.0
        %1116 = vmatprep.subr.mxu0 0.0
        %1117 = vmatpush2.msra.mxu0 0.0
        %1118 = vmatprep.subr.mxu0 0.0
        %1119 = vmatpush2.msra.mxu0 0.0
        %1120 = vmatprep.subr.mxu0 0.0
        %1121 = vmatpush2.msra.mxu0 0.0
        %1122 = vmatprep.subr.mxu0 0.0
        %1123 = vmatpush2.msra.mxu0 0.0
        %1124 = vmatprep.mubr.f32.mxu0 0.0
        %1125 = vmatmul.mubr.f32.gmra.mxu0 %v1058
        %v1126 = vpop.f32.mrf.mxu0
        %v1127 = vadd.f32 0.0, %v1126
        %v1128 = vpop.f32.mrf.mxu0
        %1129 = vdwg.mxu0
        %1130 = vrot.lane.b32.xlu0 %v540, 96
        %v1131 = vpop.permute.xlu0 %1130
        %v1134 = vsel %vm933, %v976, 0
        %1136 = vmatprep.subr.mxu0 0.0
        %1137 = vmatpush1.msra.mxu0 0.0
        %1138 = vmatprep.subr.mxu0 0.0
        %1139 = vmatpush1.msra.mxu0 0.0
        %1140 = vmatprep.subr.mxu0 0.0
        %1141 = vmatpush1.msra.mxu0 0.0
        %1142 = vmatprep.subr.mxu0 0.0
        %1143 = vmatpush1.msra.mxu0 0.0
        %1144 = vmatprep.subr.mxu0 0.0
        %1145 = vmatpush1.msra.mxu0 0.0
        %1146 = vmatprep.subr.mxu0 0.0
        %1147 = vmatpush1.msra.mxu0 0.0
        %1148 = vmatprep.subr.mxu0 0.0
        %1149 = vmatpush1.msra.mxu0 0.0
        %1150 = vmatprep.subr.mxu0 0.0
        %1151 = vmatpush1.msra.mxu0 0.0
        %1152 = vmatprep.subr.mxu0 0.0
        %1153 = vmatpush1.msra.mxu0 0.0
        %1154 = vmatprep.subr.mxu0 0.0
        %1155 = vmatpush1.msra.mxu0 0.0
        %1156 = vmatprep.subr.mxu0 0.0
        %1157 = vmatpush1.msra.mxu0 0.0
        %1158 = vmatprep.subr.mxu0 0.0
        %1159 = vmatpush1.msra.mxu0 0.0
        %1160 = vmatprep.subr.mxu0 0.0
        %1161 = vmatpush1.msra.mxu0 0.0
        %1162 = vmatprep.subr.mxu0 0.0
        %1163 = vmatpush1.msra.mxu0 0.0
        %1164 = vmatprep.subr.mxu0 0.0
        %1165 = vmatpush1.msra.mxu0 0.0
        %1166 = vmatprep.subr.mxu0 0.0
        %1167 = vmatpush1.msra.mxu0 %v1131
        %1168 = vmatprep.subr.mxu0 0.0
        %1169 = vmatpush2.msra.mxu0 0.0
        %1170 = vmatprep.subr.mxu0 0.0
        %1171 = vmatpush2.msra.mxu0 0.0
        %1172 = vmatprep.subr.mxu0 0.0
        %1173 = vmatpush2.msra.mxu0 0.0
        %1174 = vmatprep.subr.mxu0 0.0
        %1175 = vmatpush2.msra.mxu0 0.0
        %1176 = vmatprep.subr.mxu0 0.0
        %1177 = vmatpush2.msra.mxu0 0.0
        %1178 = vmatprep.subr.mxu0 0.0
        %1179 = vmatpush2.msra.mxu0 0.0
        %1180 = vmatprep.subr.mxu0 0.0
        %1181 = vmatpush2.msra.mxu0 0.0
        %1182 = vmatprep.subr.mxu0 0.0
        %1183 = vmatpush2.msra.mxu0 0.0
        %1184 = vmatprep.subr.mxu0 0.0
        %1185 = vmatpush2.msra.mxu0 0.0
        %1186 = vmatprep.subr.mxu0 0.0
        %1187 = vmatpush2.msra.mxu0 0.0
        %1188 = vmatprep.subr.mxu0 0.0
        %1189 = vmatpush2.msra.mxu0 0.0
        %1190 = vmatprep.subr.mxu0 0.0
        %1191 = vmatpush2.msra.mxu0 0.0
        %1192 = vmatprep.subr.mxu0 0.0
        %1193 = vmatpush2.msra.mxu0 0.0
        %1194 = vmatprep.subr.mxu0 0.0
        %1195 = vmatpush2.msra.mxu0 0.0
        %1196 = vmatprep.subr.mxu0 0.0
        %1197 = vmatpush2.msra.mxu0 0.0
        %1198 = vmatprep.subr.mxu0 0.0
        %1199 = vmatpush2.msra.mxu0 0.0
        %1200 = vmatprep.mubr.f32.mxu0 0.0
        %1201 = vmatmul.mubr.f32.gmra.mxu0 %v1134
        %v1202 = vpop.f32.mrf.mxu0
        %v1203 = vadd.f32 0.0, %v1202
        %v1204 = vpop.f32.mrf.mxu0
        %1205 = vdwg.mxu0
        %1206 = vrot.lane.b32.xlu0 %v610, 96
        %v1207 = vpop.permute.xlu0 %1206
        %v1210 = vsel %vm933, %v977, 0
        %1212 = vmatprep.subr.mxu0 0.0
        %1213 = vmatpush1.msra.mxu0 0.0
        %1214 = vmatprep.subr.mxu0 0.0
        %1215 = vmatpush1.msra.mxu0 0.0
        %1216 = vmatprep.subr.mxu0 0.0
        %1217 = vmatpush1.msra.mxu0 0.0
        %1218 = vmatprep.subr.mxu0 0.0
        %1219 = vmatpush1.msra.mxu0 0.0
        %1220 = vmatprep.subr.mxu0 0.0
        %1221 = vmatpush1.msra.mxu0 0.0
        %1222 = vmatprep.subr.mxu0 0.0
        %1223 = vmatpush1.msra.mxu0 0.0
        %1224 = vmatprep.subr.mxu0 0.0
        %1225 = vmatpush1.msra.mxu0 0.0
        %1226 = vmatprep.subr.mxu0 0.0
        %1227 = vmatpush1.msra.mxu0 0.0
        %1228 = vmatprep.subr.mxu0 0.0
        %1229 = vmatpush1.msra.mxu0 0.0
        %1230 = vmatprep.subr.mxu0 0.0
        %1231 = vmatpush1.msra.mxu0 0.0
        %1232 = vmatprep.subr.mxu0 0.0
        %1233 = vmatpush1.msra.mxu0 0.0
        %1234 = vmatprep.subr.mxu0 0.0
        %1235 = vmatpush1.msra.mxu0 0.0
        %1236 = vmatprep.subr.mxu0 0.0
        %1237 = vmatpush1.msra.mxu0 0.0
        %1238 = vmatprep.subr.mxu0 0.0
        %1239 = vmatpush1.msra.mxu0 0.0
        %1240 = vmatprep.subr.mxu0 0.0
        %1241 = vmatpush1.msra.mxu0 0.0
        %1242 = vmatprep.subr.mxu0 0.0
        %1243 = vmatpush1.msra.mxu0 %v1207
        %1244 = vmatprep.subr.mxu0 0.0
        %1245 = vmatpush2.msra.mxu0 0.0
        %1246 = vmatprep.subr.mxu0 0.0
        %1247 = vmatpush2.msra.mxu0 0.0
        %1248 = vmatprep.subr.mxu0 0.0
        %1249 = vmatpush2.msra.mxu0 0.0
        %1250 = vmatprep.subr.mxu0 0.0
        %1251 = vmatpush2.msra.mxu0 0.0
        %1252 = vmatprep.subr.mxu0 0.0
        %1253 = vmatpush2.msra.mxu0 0.0
        %1254 = vmatprep.subr.mxu0 0.0
        %1255 = vmatpush2.msra.mxu0 0.0
        %1256 = vmatprep.subr.mxu0 0.0
        %1257 = vmatpush2.msra.mxu0 0.0
        %1258 = vmatprep.subr.mxu0 0.0
        %1259 = vmatpush2.msra.mxu0 0.0
        %1260 = vmatprep.subr.mxu0 0.0
        %1261 = vmatpush2.msra.mxu0 0.0
        %1262 = vmatprep.subr.mxu0 0.0
        %1263 = vmatpush2.msra.mxu0 0.0
        %1264 = vmatprep.subr.mxu0 0.0
        %1265 = vmatpush2.msra.mxu0 0.0
        %1266 = vmatprep.subr.mxu0 0.0
        %1267 = vmatpush2.msra.mxu0 0.0
        %1268 = vmatprep.subr.mxu0 0.0
        %1269 = vmatpush2.msra.mxu0 0.0
        %1270 = vmatprep.subr.mxu0 0.0
        %1271 = vmatpush2.msra.mxu0 0.0
        %1272 = vmatprep.subr.mxu0 0.0
        %1273 = vmatpush2.msra.mxu0 0.0
        %1274 = vmatprep.subr.mxu0 0.0
        %1275 = vmatpush2.msra.mxu0 0.0
        %1276 = vmatprep.mubr.f32.mxu0 0.0
        %1277 = vmatmul.mubr.f32.gmra.mxu0 %v1210
        %v1278 = vpop.f32.mrf.mxu0
        %v1279 = vadd.f32 0.0, %v1278
        %v1280 = vpop.f32.mrf.mxu0
        %1281 = vdwg.mxu0
        %v1282 = vmax.f32 %v1051, 0.0
        %v1283 = vmax.f32 %v1127, 0.0
        %v1284 = vmax.f32 %v1203, 0.0
        %v1285 = vmax.f32 %v1279, 0.0
        %v1286 = vld [vmem:[#allocation8] sm:$0xff]
        %v1287 = vld [vmem:[#allocation8 + $0x8] sm:$0xff]
        %v1288 = vld [vmem:[#allocation8 + $0x10] sm:$0xff]
        %v1289 = vld [vmem:[#allocation8 + $0x18] sm:$0xff]
        %v1290 = vld [vmem:[#allocation8 + $0x20] sm:$0xff]
        %v1291 = vld [vmem:[#allocation8 + $0x28] sm:$0xff]
        %v1292 = vld [vmem:[#allocation8 + $0x30] sm:$0xff]
        %v1293 = vld [vmem:[#allocation8 + $0x38] sm:$0xff]
        %v1295 = vsel %vm621, %v1282, 0
        %1297 = vmatprep.subr.mxu0 0.0
        %1298 = vmatpush1.msra.mxu0 0.0
        %1299 = vmatprep.subr.mxu0 0.0
        %1300 = vmatpush1.msra.mxu0 0.0
        %1301 = vmatprep.subr.mxu0 0.0
        %1302 = vmatpush1.msra.mxu0 0.0
        %1303 = vmatprep.subr.mxu0 0.0
        %1304 = vmatpush1.msra.mxu0 0.0
        %1305 = vmatprep.subr.mxu0 0.0
        %1306 = vmatpush1.msra.mxu0 0.0
        %1307 = vmatprep.subr.mxu0 0.0
        %1308 = vmatpush1.msra.mxu0 0.0
        %1309 = vmatprep.subr.mxu0 0.0
        %1310 = vmatpush1.msra.mxu0 0.0
        %1311 = vmatprep.subr.mxu0 0.0
        %1312 = vmatpush1.msra.mxu0 0.0
        %1313 = vmatprep.subr.mxu0 0.0
        %1314 = vmatpush1.msra.mxu0 0.0
        %1315 = vmatprep.subr.mxu0 0.0
        %1316 = vmatpush1.msra.mxu0 0.0
        %1317 = vmatprep.subr.mxu0 0.0
        %1318 = vmatpush1.msra.mxu0 0.0
        %1319 = vmatprep.subr.mxu0 0.0
        %1320 = vmatpush1.msra.mxu0 0.0
        %1321 = vmatprep.subr.mxu0 0.0
        %1322 = vmatpush1.msra.mxu0 0.0
        %1323 = vmatprep.subr.mxu0 0.0
        %1324 = vmatpush1.msra.mxu0 0.0
        %1325 = vmatprep.subr.mxu0 0.0
        %1326 = vmatpush1.msra.mxu0 %v1287
        %1327 = vmatprep.subr.mxu0 0.0
        %1328 = vmatpush1.msra.mxu0 %v1286
        %1329 = vmatprep.subr.mxu0 0.0
        %1330 = vmatpush2.msra.mxu0 0.0
        %1331 = vmatprep.subr.mxu0 0.0
        %1332 = vmatpush2.msra.mxu0 0.0
        %1333 = vmatprep.subr.mxu0 0.0
        %1334 = vmatpush2.msra.mxu0 0.0
        %1335 = vmatprep.subr.mxu0 0.0
        %1336 = vmatpush2.msra.mxu0 0.0
        %1337 = vmatprep.subr.mxu0 0.0
        %1338 = vmatpush2.msra.mxu0 0.0
        %1339 = vmatprep.subr.mxu0 0.0
        %1340 = vmatpush2.msra.mxu0 0.0
        %1341 = vmatprep.subr.mxu0 0.0
        %1342 = vmatpush2.msra.mxu0 0.0
        %1343 = vmatprep.subr.mxu0 0.0
        %1344 = vmatpush2.msra.mxu0 0.0
        %1345 = vmatprep.subr.mxu0 0.0
        %1346 = vmatpush2.msra.mxu0 0.0
        %1347 = vmatprep.subr.mxu0 0.0
        %1348 = vmatpush2.msra.mxu0 0.0
        %1349 = vmatprep.subr.mxu0 0.0
        %1350 = vmatpush2.msra.mxu0 0.0
        %1351 = vmatprep.subr.mxu0 0.0
        %1352 = vmatpush2.msra.mxu0 0.0
        %1353 = vmatprep.subr.mxu0 0.0
        %1354 = vmatpush2.msra.mxu0 0.0
        %1355 = vmatprep.subr.mxu0 0.0
        %1356 = vmatpush2.msra.mxu0 0.0
        %1357 = vmatprep.subr.mxu0 0.0
        %1358 = vmatpush2.msra.mxu0 0.0
        %1359 = vmatprep.subr.mxu0 0.0
        %1360 = vmatpush2.msra.mxu0 0.0
        %1361 = vmatprep.mubr.f32.mxu0 0.0
        %1362 = vmatmul.mubr.f32.gmra.mxu0 %v1295
        %v1363 = vpop.f32.mrf.mxu0
        %v1364 = vadd.f32 0.0, %v1363
        %v1365 = vpop.f32.mrf.mxu0
        %1366 = vdwg.mxu0
        %v1368 = vsel %vm621, %v1283, 0
        %1370 = vmatprep.subr.mxu0 0.0
        %1371 = vmatpush1.msra.mxu0 0.0
        %1372 = vmatprep.subr.mxu0 0.0
        %1373 = vmatpush1.msra.mxu0 0.0
        %1374 = vmatprep.subr.mxu0 0.0
        %1375 = vmatpush1.msra.mxu0 0.0
        %1376 = vmatprep.subr.mxu0 0.0
        %1377 = vmatpush1.msra.mxu0 0.0
        %1378 = vmatprep.subr.mxu0 0.0
        %1379 = vmatpush1.msra.mxu0 0.0
        %1380 = vmatprep.subr.mxu0 0.0
        %1381 = vmatpush1.msra.mxu0 0.0
        %1382 = vmatprep.subr.mxu0 0.0
        %1383 = vmatpush1.msra.mxu0 0.0
        %1384 = vmatprep.subr.mxu0 0.0
        %1385 = vmatpush1.msra.mxu0 0.0
        %1386 = vmatprep.subr.mxu0 0.0
        %1387 = vmatpush1.msra.mxu0 0.0
        %1388 = vmatprep.subr.mxu0 0.0
        %1389 = vmatpush1.msra.mxu0 0.0
        %1390 = vmatprep.subr.mxu0 0.0
        %1391 = vmatpush1.msra.mxu0 0.0
        %1392 = vmatprep.subr.mxu0 0.0
        %1393 = vmatpush1.msra.mxu0 0.0
        %1394 = vmatprep.subr.mxu0 0.0
        %1395 = vmatpush1.msra.mxu0 0.0
        %1396 = vmatprep.subr.mxu0 0.0
        %1397 = vmatpush1.msra.mxu0 0.0
        %1398 = vmatprep.subr.mxu0 0.0
        %1399 = vmatpush1.msra.mxu0 %v1289
        %1400 = vmatprep.subr.mxu0 0.0
        %1401 = vmatpush1.msra.mxu0 %v1288
        %1402 = vmatprep.subr.mxu0 0.0
        %1403 = vmatpush2.msra.mxu0 0.0
        %1404 = vmatprep.subr.mxu0 0.0
        %1405 = vmatpush2.msra.mxu0 0.0
        %1406 = vmatprep.subr.mxu0 0.0
        %1407 = vmatpush2.msra.mxu0 0.0
        %1408 = vmatprep.subr.mxu0 0.0
        %1409 = vmatpush2.msra.mxu0 0.0
        %1410 = vmatprep.subr.mxu0 0.0
        %1411 = vmatpush2.msra.mxu0 0.0
        %1412 = vmatprep.subr.mxu0 0.0
        %1413 = vmatpush2.msra.mxu0 0.0
        %1414 = vmatprep.subr.mxu0 0.0
        %1415 = vmatpush2.msra.mxu0 0.0
        %1416 = vmatprep.subr.mxu0 0.0
        %1417 = vmatpush2.msra.mxu0 0.0
        %1418 = vmatprep.subr.mxu0 0.0
        %1419 = vmatpush2.msra.mxu0 0.0
        %1420 = vmatprep.subr.mxu0 0.0
        %1421 = vmatpush2.msra.mxu0 0.0
        %1422 = vmatprep.subr.mxu0 0.0
        %1423 = vmatpush2.msra.mxu0 0.0
        %1424 = vmatprep.subr.mxu0 0.0
        %1425 = vmatpush2.msra.mxu0 0.0
        %1426 = vmatprep.subr.mxu0 0.0
        %1427 = vmatpush2.msra.mxu0 0.0
        %1428 = vmatprep.subr.mxu0 0.0
        %1429 = vmatpush2.msra.mxu0 0.0
        %1430 = vmatprep.subr.mxu0 0.0
        %1431 = vmatpush2.msra.mxu0 0.0
        %1432 = vmatprep.subr.mxu0 0.0
        %1433 = vmatpush2.msra.mxu0 0.0
        %1434 = vmatprep.mubr.f32.mxu0 0.0
        %1435 = vmatmul.mubr.f32.gmra.mxu0 %v1368
        %v1436 = vpop.f32.mrf.mxu0
        %v1437 = vadd.f32 0.0, %v1436
        %v1438 = vpop.f32.mrf.mxu0
        %1439 = vdwg.mxu0
        %v1441 = vsel %vm621, %v1284, 0
        %1443 = vmatprep.subr.mxu0 0.0
        %1444 = vmatpush1.msra.mxu0 0.0
        %1445 = vmatprep.subr.mxu0 0.0
        %1446 = vmatpush1.msra.mxu0 0.0
        %1447 = vmatprep.subr.mxu0 0.0
        %1448 = vmatpush1.msra.mxu0 0.0
        %1449 = vmatprep.subr.mxu0 0.0
        %1450 = vmatpush1.msra.mxu0 0.0
        %1451 = vmatprep.subr.mxu0 0.0
        %1452 = vmatpush1.msra.mxu0 0.0
        %1453 = vmatprep.subr.mxu0 0.0
        %1454 = vmatpush1.msra.mxu0 0.0
        %1455 = vmatprep.subr.mxu0 0.0
        %1456 = vmatpush1.msra.mxu0 0.0
        %1457 = vmatprep.subr.mxu0 0.0
        %1458 = vmatpush1.msra.mxu0 0.0
        %1459 = vmatprep.subr.mxu0 0.0
        %1460 = vmatpush1.msra.mxu0 0.0
        %1461 = vmatprep.subr.mxu0 0.0
        %1462 = vmatpush1.msra.mxu0 0.0
        %1463 = vmatprep.subr.mxu0 0.0
        %1464 = vmatpush1.msra.mxu0 0.0
        %1465 = vmatprep.subr.mxu0 0.0
        %1466 = vmatpush1.msra.mxu0 0.0
        %1467 = vmatprep.subr.mxu0 0.0
        %1468 = vmatpush1.msra.mxu0 0.0
        %1469 = vmatprep.subr.mxu0 0.0
        %1470 = vmatpush1.msra.mxu0 0.0
        %1471 = vmatprep.subr.mxu0 0.0
        %1472 = vmatpush1.msra.mxu0 %v1291
        %1473 = vmatprep.subr.mxu0 0.0
        %1474 = vmatpush1.msra.mxu0 %v1290
        %1475 = vmatprep.subr.mxu0 0.0
        %1476 = vmatpush2.msra.mxu0 0.0
        %1477 = vmatprep.subr.mxu0 0.0
        %1478 = vmatpush2.msra.mxu0 0.0
        %1479 = vmatprep.subr.mxu0 0.0
        %1480 = vmatpush2.msra.mxu0 0.0
        %1481 = vmatprep.subr.mxu0 0.0
        %1482 = vmatpush2.msra.mxu0 0.0
        %1483 = vmatprep.subr.mxu0 0.0
        %1484 = vmatpush2.msra.mxu0 0.0
        %1485 = vmatprep.subr.mxu0 0.0
        %1486 = vmatpush2.msra.mxu0 0.0
        %1487 = vmatprep.subr.mxu0 0.0
        %1488 = vmatpush2.msra.mxu0 0.0
        %1489 = vmatprep.subr.mxu0 0.0
        %1490 = vmatpush2.msra.mxu0 0.0
        %1491 = vmatprep.subr.mxu0 0.0
        %1492 = vmatpush2.msra.mxu0 0.0
        %1493 = vmatprep.subr.mxu0 0.0
        %1494 = vmatpush2.msra.mxu0 0.0
        %1495 = vmatprep.subr.mxu0 0.0
        %1496 = vmatpush2.msra.mxu0 0.0
        %1497 = vmatprep.subr.mxu0 0.0
        %1498 = vmatpush2.msra.mxu0 0.0
        %1499 = vmatprep.subr.mxu0 0.0
        %1500 = vmatpush2.msra.mxu0 0.0
        %1501 = vmatprep.subr.mxu0 0.0
        %1502 = vmatpush2.msra.mxu0 0.0
        %1503 = vmatprep.subr.mxu0 0.0
        %1504 = vmatpush2.msra.mxu0 0.0
        %1505 = vmatprep.subr.mxu0 0.0
        %1506 = vmatpush2.msra.mxu0 0.0
        %1507 = vmatprep.mubr.f32.mxu0 0.0
        %1508 = vmatmul.mubr.f32.gmra.mxu0 %v1441
        %v1509 = vpop.f32.mrf.mxu0
        %v1510 = vadd.f32 0.0, %v1509
        %v1511 = vpop.f32.mrf.mxu0
        %1512 = vdwg.mxu0
        %v1514 = vsel %vm621, %v1285, 0
        %1516 = vmatprep.subr.mxu0 0.0
        %1517 = vmatpush1.msra.mxu0 0.0
        %1518 = vmatprep.subr.mxu0 0.0
        %1519 = vmatpush1.msra.mxu0 0.0
        %1520 = vmatprep.subr.mxu0 0.0
        %1521 = vmatpush1.msra.mxu0 0.0
        %1522 = vmatprep.subr.mxu0 0.0
        %1523 = vmatpush1.msra.mxu0 0.0
        %1524 = vmatprep.subr.mxu0 0.0
        %1525 = vmatpush1.msra.mxu0 0.0
        %1526 = vmatprep.subr.mxu0 0.0
        %1527 = vmatpush1.msra.mxu0 0.0
        %1528 = vmatprep.subr.mxu0 0.0
        %1529 = vmatpush1.msra.mxu0 0.0
        %1530 = vmatprep.subr.mxu0 0.0
        %1531 = vmatpush1.msra.mxu0 0.0
        %1532 = vmatprep.subr.mxu0 0.0
        %1533 = vmatpush1.msra.mxu0 0.0
        %1534 = vmatprep.subr.mxu0 0.0
        %1535 = vmatpush1.msra.mxu0 0.0
        %1536 = vmatprep.subr.mxu0 0.0
        %1537 = vmatpush1.msra.mxu0 0.0
        %1538 = vmatprep.subr.mxu0 0.0
        %1539 = vmatpush1.msra.mxu0 0.0
        %1540 = vmatprep.subr.mxu0 0.0
        %1541 = vmatpush1.msra.mxu0 0.0
        %1542 = vmatprep.subr.mxu0 0.0
        %1543 = vmatpush1.msra.mxu0 0.0
        %1544 = vmatprep.subr.mxu0 0.0
        %1545 = vmatpush1.msra.mxu0 %v1293
        %1546 = vmatprep.subr.mxu0 0.0
        %1547 = vmatpush1.msra.mxu0 %v1292
        %1548 = vmatprep.subr.mxu0 0.0
        %1549 = vmatpush2.msra.mxu0 0.0
        %1550 = vmatprep.subr.mxu0 0.0
        %1551 = vmatpush2.msra.mxu0 0.0
        %1552 = vmatprep.subr.mxu0 0.0
        %1553 = vmatpush2.msra.mxu0 0.0
        %1554 = vmatprep.subr.mxu0 0.0
        %1555 = vmatpush2.msra.mxu0 0.0
        %1556 = vmatprep.subr.mxu0 0.0
        %1557 = vmatpush2.msra.mxu0 0.0
        %1558 = vmatprep.subr.mxu0 0.0
        %1559 = vmatpush2.msra.mxu0 0.0
        %1560 = vmatprep.subr.mxu0 0.0
        %1561 = vmatpush2.msra.mxu0 0.0
        %1562 = vmatprep.subr.mxu0 0.0
        %1563 = vmatpush2.msra.mxu0 0.0
        %1564 = vmatprep.subr.mxu0 0.0
        %1565 = vmatpush2.msra.mxu0 0.0
        %1566 = vmatprep.subr.mxu0 0.0
        %1567 = vmatpush2.msra.mxu0 0.0
        %1568 = vmatprep.subr.mxu0 0.0
        %1569 = vmatpush2.msra.mxu0 0.0
        %1570 = vmatprep.subr.mxu0 0.0
        %1571 = vmatpush2.msra.mxu0 0.0
        %1572 = vmatprep.subr.mxu0 0.0
        %1573 = vmatpush2.msra.mxu0 0.0
        %1574 = vmatprep.subr.mxu0 0.0
        %1575 = vmatpush2.msra.mxu0 0.0
        %1576 = vmatprep.subr.mxu0 0.0
        %1577 = vmatpush2.msra.mxu0 0.0
        %1578 = vmatprep.subr.mxu0 0.0
        %1579 = vmatpush2.msra.mxu0 0.0
        %1580 = vmatprep.mubr.f32.mxu0 0.0
        %1581 = vmatmul.mubr.f32.gmra.mxu0 %v1514
        %v1582 = vpop.f32.mrf.mxu0
        %v1583 = vadd.f32 0.0, %v1582
        %v1584 = vpop.f32.mrf.mxu0
        %1585 = vdwg.mxu0
        %v1586 = vadd.f32 %v1364, %v1437
        %v1587 = vadd.f32 %v1586, %v1510
        %v1588 = vadd.f32 %v1587, %v1583
        %v1589 = vld [vmem:[%s4] sm:$0x1]
        %v1591 = vlaneseq
        %v1592 = vshrl.u32 %v1591, 7
        %v1593 = vsub.s32 0, %v1592
        %v1594 = vrot.slane %v1589, %v1593
        %v1596 = vadd.f32 %v1588, %v1594
        %1597 = vst [vmem:[%s283] sm:$0xff] %v1596
        %s1598 = sand.u32 %s142, 1
        %s1599 = scalar_lea.sflag [#allocation4], %s1598
        %s1600 = sand.u32 %s142, 1
        %s1601 = smul.addr %s1600, 8
        %s1602 = scalar_lea.vmem [#allocation10], %s1601
        // Predicated region
        $region57: #{multi_head_attention.1} parent=39 // pred_check
          %p1603 = pneg %p152
        $region58: #{multi_head_attention.1} parent=39 // pred_check_branch
          %1605 = sbr.rel (%p1603) target = $region60
        $region59: #{multi_head_attention.1} parent=39 // pred_region
          %s1607 = ssub.s32 128, 128
          %1608 = vsyncadd %s1599, %s1607
          %s1609 = smul.addr %s24, 128
          %s1610 = scalar_lea.hbm %s5, %s1609
          %s1612 = sshll.u32 %s1602, 4
          %s1613 = int_to_ptr.vmem [resolvable:$true] %s1612
          %1615 = dma.vmem_to_hbm [thread:$0]  %s1613, 128, %s1610, %s1599
        $region60: #{multi_head_attention.1} parent=39 // pred_fallthru
          _
      $region40: #{multi_head_attention.1} parent=5 // pred_fallthru
        _
      %p1616 = scmp.le.s32.totalorder 2, %s19
      // Predicated region
      $region61: #{multi_head_attention.1} parent=5 // pred_check
        %p1617 = pneg %p1616
      $region62: #{multi_head_attention.1} parent=5 // pred_check_branch
        %1619 = sbr.rel (%p1617) target = $region64
      $region63: #{multi_head_attention.1} parent=5 // pred_region
        %s1620 = ssub.s32 %s19, 2
        // Predicated region
        $region65: #{multi_head_attention.1} parent=63 // pred_check
          %p1621 = pneg %p158
        $region66: #{multi_head_attention.1} parent=63 // pred_check_branch
          %1623 = sbr.rel (%p1621) target = $region68
        $region67: #{multi_head_attention.1} parent=63 // pred_region
          %s1624 = sand.u32 %s143, 1
          %s1625 = scalar_lea.sflag [#allocation4], %s1624
          %s1626 = sand.u32 %s143, 1
          %s1627 = smul.addr %s1626, 8
          %s1628 = scalar_lea.vmem [#allocation10], %s1627
          %1629 = dma.done %s1625, 128
        $region68: #{multi_head_attention.1} parent=63 // pred_fallthru
          _
      $region64: #{multi_head_attention.1} parent=5 // pred_fallthru
        _
    $region6: #{multi_head_attention.1} parent=1 // loop_footer
      %s23 = sadd.s32 1, %s19
    $region7: #{multi_head_attention.1} parent=1 // loop_footer_branch
      %18 = sbr.rel target = $region3
    $region8: #{multi_head_attention.1} parent=1 // loop_exit
      _
    %1630 = vsyncpa [#allocation3], 1
    %s1631 = scalar_lea.sflag [#allocation3], 1
    %1632 = vsyncpa %s1631, 1
    %1633 = vsyncpa [#allocation6], 1
    %1634 = vsyncpa [#allocation9], 1
    %1635 = vsyncpa [#allocation4], 1
    %s1636 = scalar_lea.sflag [#allocation4], 1
    %1637 = vsyncpa %s1636, 1

</llo_original>
